<compile_context>
chip_gen: v6e
topology: v6e:2x2x1
jax: 0.10.0
libtpu: 0.0.40
codegen_flags: <defaults>
</compile_context>

<pallas_src>
import jax
import jax.numpy as jnp
import numpy as np
from jax.experimental import pallas as pl
from jax.experimental.pallas import tpu as pltpu


# --------------------------------------------------------------------------
# In-kernel helpers
# --------------------------------------------------------------------------
def _conv3x3_im2col(xp, w_bf16, H, W, C):
    """3x3/stride-1 conv of one padded tile as a single MXU matmul.

    xp:      (H+2, W+2, C) f32 zero-padded activation tile.
    w_bf16:  (9*C, C) bf16 weights, rows ordered (kh, kw, cin).
    returns: (H*W, C) f32.
    """
    taps = []
    for dh in range(3):
        for dw in range(3):
            taps.append(xp[dh:dh + H, dw:dw + W, :].reshape(H * W, C))
    lhs = jnp.concatenate(taps, axis=1).astype(jnp.bfloat16)        # (H*W, 9C)
    return jnp.dot(lhs, w_bf16, preferred_element_type=jnp.float32)


def _conv1_stats_kernel(x_ref, w_ref, y_ref, s_ref, ss_ref, pad_scr):
    """Pass 1: conv1 on one image + per-image BN partial sums."""
    _, H, W, C = x_ref.shape
    # Zero the halo scratch every step (safe under megacore grid splitting),
    # then write the unpadded tile into the interior -> in-kernel padding.
    pad_scr[...] = jnp.zeros_like(pad_scr)
    pad_scr[1:H + 1, 1:W + 1, :] = x_ref[0]
    y = _conv3x3_im2col(pad_scr[...], w_ref[...], H, W, C)          # (H*W, C) f32
    y_ref[...] = y.reshape(1, H, W, C)
    s_ref[...] = jnp.sum(y, axis=0).reshape(1, 1, C)
    ss_ref[...] = jnp.sum(y * y, axis=0).reshape(1, 1, C)


def _bn_relu_conv2_stats_kernel(y1_ref, scale_ref, shift_ref, w_ref,
                                y2_ref, s_ref, ss_ref, pad_scr):
    """Pass 2: z = relu(bn1(y1)) as one FMA, conv2(z), per-image BN partials."""
    _, H, W, C = y1_ref.shape
    z = jnp.maximum(y1_ref[0] * scale_ref[...] + shift_ref[...], 0.0)
    pad_scr[...] = jnp.zeros_like(pad_scr)
    pad_scr[1:H + 1, 1:W + 1, :] = z
    y2 = _conv3x3_im2col(pad_scr[...], w_ref[...], H, W, C)
    y2_ref[...] = y2.reshape(1, H, W, C)
    s_ref[...] = jnp.sum(y2, axis=0).reshape(1, 1, C)
    ss_ref[...] = jnp.sum(y2 * y2, axis=0).reshape(1, 1, C)


def _bn_add_relu_kernel(y2_ref, x_ref, scale_ref, shift_ref, o_ref):
    """Pass 3: out = relu(bn1(y2) + identity) with folded BN FMA."""
    o_ref[...] = jnp.maximum(
        y2_ref[...] * scale_ref[...] + shift_ref[...] + x_ref[...], 0.0)


# --------------------------------------------------------------------------
# Wrapper
# --------------------------------------------------------------------------
def _fold_bn(psum, psumsq, gamma, beta, count, eps):
    """(C,)-sized glue: fold batch stats into a single scale/shift pair."""
    s = jnp.sum(psum, axis=0).reshape(-1)
    ss = jnp.sum(psumsq, axis=0).reshape(-1)
    mean = s / count
    var = jnp.maximum(ss / count - mean * mean, 0.0)   # biased variance
    scale = gamma * jax.lax.rsqrt(var + eps)
    shift = beta - mean * scale
    return scale.reshape(1, -1), shift.reshape(1, -1)


def basic_block_pallas(x_nchw, w1, w2, gamma, beta, eps=1e-5):
    """x_nchw: (N,C,H,W) f32. w1,w2: (3,3,C,C) HWIO. gamma/beta: (C,)."""
    N, C, H, W = x_nchw.shape
    count = N * H * W

    # NCHW -> NHWC (channels on the TPU lane axis).
    # TODO(synk): keep NHWC end-to-end to drop these two XLA transposes.
    x = jnp.transpose(x_nchw, (0, 2, 3, 1)).astype(jnp.float32)

    # Weights: (kh, kw, cin, cout) -> (9*C, C), bf16 for the MXU.
    w1r = w1.reshape(9 * C, C).astype(jnp.bfloat16)
    w2r = w2.reshape(9 * C, C).astype(jnp.bfloat16)
    gamma = gamma.astype(jnp.float32)
    beta = beta.astype(jnp.float32)

    cparams = pltpu.CompilerParams(
        dimension_semantics=("parallel",),
        # Raise above the 16 MiB (v5e) / 32 MiB (v6e/v7x) scoped defaults while
        # staying under v7x's 64 MiB physical VMEM per core.
        vmem_limit_bytes=48 * 1024 * 1024,
    )

    img_spec = pl.BlockSpec((1, H, W, C), lambda n: (n, 0, 0, 0))
    w_spec = pl.BlockSpec((9 * C, C), lambda n: (0, 0))
    vec_spec = pl.BlockSpec((1, C), lambda n: (0, 0))
    stat_spec = pl.BlockSpec((1, 1, C), lambda n: (n, 0, 0))
    pad_scratch = pltpu.VMEM((H + 2, W + 2, C), jnp.float32)

    # ---- pass 1: conv1 + BN1 partial stats --------------------------------
    y1, s1, ss1 = pl.pallas_call(
        _conv1_stats_kernel,
        grid=(N,),
        in_specs=[img_spec, w_spec],
        out_specs=(img_spec, stat_spec, stat_spec),
        out_shape=(jax.ShapeDtypeStruct((N, H, W, C), jnp.float32),
                   jax.ShapeDtypeStruct((N, 1, C), jnp.float32),
                   jax.ShapeDtypeStruct((N, 1, C), jnp.float32)),
        scratch_shapes=[pad_scratch],
        compiler_params=cparams,
    )(x, w1r)
    scale1, shift1 = _fold_bn(s1, ss1, gamma, beta, count, eps)

    # ---- pass 2: bn1 + relu -> conv2 + BN2 partial stats -------------------
    y2, s2, ss2 = pl.pallas_call(
        _bn_relu_conv2_stats_kernel,
        grid=(N,),
        in_specs=[img_spec, vec_spec, vec_spec, w_spec],
        out_specs=(img_spec, stat_spec, stat_spec),
        out_shape=(jax.ShapeDtypeStruct((N, H, W, C), jnp.float32),
                   jax.ShapeDtypeStruct((N, 1, C), jnp.float32),
                   jax.ShapeDtypeStruct((N, 1, C), jnp.float32)),
        scratch_shapes=[pad_scratch],
        compiler_params=cparams,
    )(y1, scale1, shift1, w2r)
    scale2, shift2 = _fold_bn(s2, ss2, gamma, beta, count, eps)

    # ---- pass 3: bn1(y2) + identity -> relu --------------------------------
    out = pl.pallas_call(
        _bn_add_relu_kernel,
        grid=(N,),
        in_specs=[img_spec, img_spec, vec_spec, vec_spec],
        out_specs=img_spec,
        out_shape=jax.ShapeDtypeStruct((N, H, W, C), jnp.float32),
        compiler_params=cparams,
    )(y2, x, scale2, shift2)

    return jnp.transpose(out, (0, 3, 1, 2))


# --------------------------------------------------------------------------
# Pure-JAX reference (NCHW), mirrors the PyTorch forward in training mode.
# Conv inputs are cast to bf16 with f32 accumulation to match the kernel's
# deliberate MXU precision choice.
# --------------------------------------------------------------------------
def basic_block_ref(x, w1, w2, gamma, beta, eps=1e-5):
    def conv(z, w):
        return jax.lax.conv_general_dilated(
            z.astype(jnp.bfloat16), w.astype(jnp.bfloat16),
            window_strides=(1, 1), padding="SAME",
            dimension_numbers=("NCHW", "HWIO", "NCHW"),
            preferred_element_type=jnp.float32)

    def bn(z):
        mean = jnp.mean(z, axis=(0, 2, 3), keepdims=True)
        var = jnp.mean((z - mean) ** 2, axis=(0, 2, 3), keepdims=True)
        return ((z - mean) * jax.lax.rsqrt(var + eps)
                * gamma.reshape(1, -1, 1, 1) + beta.reshape(1, -1, 1, 1))

    identity = x
    y = jax.nn.relu(bn(conv(x, w1)))
    y = bn(conv(y, w2))
    return jax.nn.relu(y + identity)


if __name__ == "__main__":
    # stride=1, downsample=None, in_channels == out_channels
    N, C, H, W = 2, 64, 16, 16
    key = jax.random.PRNGKey(0)
    kx, k1, k2, k3, k4 = jax.random.split(key, 5)

    x = jax.random.normal(kx, (N, C, H, W), jnp.float32)
    w1 = jax.random.normal(k1, (3, 3, C, C), jnp.float32) * 0.1
    w2 = jax.random.normal(k2, (3, 3, C, C), jnp.float32) * 0.1
    gamma = 1.0 + 0.1 * jax.random.normal(k3, (C,), jnp.float32)
    beta = 0.1 * jax.random.normal(k4, (C,), jnp.float32)

    out = jax.block_until_ready(basic_block_pallas(x, w1, w2, gamma, beta))
    ref = jax.block_until_ready(basic_block_ref(x, w1, w2, gamma, beta))

    np.testing.assert_allclose(np.asarray(out), np.asarray(ref),
                               rtol=1e-2, atol=1e-2)
    print("KERNEL_OK")
</pallas_src>

<mosaic_0001>
module attributes {stable_mosaic.version = 11 : i64} {
  func.func @_conv1_stats_kernel(%arg0: i32, %arg1: memref<1x16x16x64xf32, #tpu.memory_space<vmem>>, %arg2: memref<576x64xbf16, #tpu.memory_space<vmem>>, %arg3: memref<1x16x16x64xf32, #tpu.memory_space<vmem>>, %arg4: memref<1x1x64xf32, #tpu.memory_space<vmem>>, %arg5: memref<1x1x64xf32, #tpu.memory_space<vmem>>, %arg6: memref<18x18x64xf32, #tpu.memory_space<vmem>>) attributes {dimension_semantics = [#tpu.dimension_semantics<parallel>], iteration_bounds = array<i64: 2>, scalar_prefetch = 0 : i64, scratch_operands = 1 : i64, tpu.core_type = #tpu.core_type<tc>, window_params = [{transform_indices = @transform_0, window_bounds = array<i64: 1, 16, 16, 64>}, {pipeline_mode = #tpu.pipeline_mode<synchronous>, transform_indices = @transform_1, window_bounds = array<i64: 576, 64>}, {transform_indices = @transform_2, window_bounds = array<i64: 1, 16, 16, 64>}, {transform_indices = @transform_3, window_bounds = array<i64: 1, 1, 64>}, {transform_indices = @transform_4, window_bounds = array<i64: 1, 1, 64>}]} {
    %cst = arith.constant 0.000000e+00 : f32
    %0 = vector.broadcast %cst : f32 to vector<18x18x64xf32>
    %c0 = arith.constant 0 : index
    %c0_0 = arith.constant 0 : index
    %c0_1 = arith.constant 0 : index
    %1 = vector.load %arg6[%c0, %c0_0, %c0_1] : memref<18x18x64xf32, #tpu.memory_space<vmem>>, vector<18x18x64xf32>
    tpu.vector_store %arg6[%c0, %c0_0, %c0_1], %0 {strides = array<i32>} : memref<18x18x64xf32, #tpu.memory_space<vmem>>, vector<18x18x64xf32>,
    %c0_2 = arith.constant 0 : index
    %c0_3 = arith.constant 0 : index
    %c0_4 = arith.constant 0 : index
    %c0_5 = arith.constant 0 : index
    %2 = vector.load %arg1[%c0_2, %c0_3, %c0_4, %c0_5] : memref<1x16x16x64xf32, #tpu.memory_space<vmem>>, vector<1x16x16x64xf32>
    %3 = vector.shape_cast %2 : vector<1x16x16x64xf32> to vector<16x16x64xf32>
    %c1 = arith.constant 1 : index
    %c1_6 = arith.constant 1 : index
    %c0_7 = arith.constant 0 : index
    %4 = vector.load %arg6[%c1, %c1_6, %c0_7] : memref<18x18x64xf32, #tpu.memory_space<vmem>>, vector<16x16x64xf32>
    tpu.vector_store %arg6[%c1, %c1_6, %c0_7], %3 {strides = array<i32>} : memref<18x18x64xf32, #tpu.memory_space<vmem>>, vector<16x16x64xf32>,
    %c0_8 = arith.constant 0 : index
    %c0_9 = arith.constant 0 : index
    %c0_10 = arith.constant 0 : index
    %5 = vector.load %arg6[%c0_8, %c0_9, %c0_10] : memref<18x18x64xf32, #tpu.memory_space<vmem>>, vector<18x18x64xf32>
    %c0_11 = arith.constant 0 : index
    %c0_12 = arith.constant 0 : index
    %6 = vector.load %arg2[%c0_11, %c0_12] : memref<576x64xbf16, #tpu.memory_space<vmem>>, vector<576x64xbf16>
    %7 = vector.extract_strided_slice %5 {offsets = [0, 0, 0], sizes = [16, 16, 64], strides = [1, 1, 1]} : vector<18x18x64xf32> to vector<16x16x64xf32>
    %8 = vector.shape_cast %7 : vector<16x16x64xf32> to vector<256x64xf32>
    %9 = vector.extract_strided_slice %5 {offsets = [0, 1, 0], sizes = [16, 16, 64], strides = [1, 1, 1]} : vector<18x18x64xf32> to vector<16x16x64xf32>
    %10 = vector.shape_cast %9 : vector<16x16x64xf32> to vector<256x64xf32>
    %11 = vector.extract_strided_slice %5 {offsets = [0, 2, 0], sizes = [16, 16, 64], strides = [1, 1, 1]} : vector<18x18x64xf32> to vector<16x16x64xf32>
    %12 = vector.shape_cast %11 : vector<16x16x64xf32> to vector<256x64xf32>
    %13 = vector.extract_strided_slice %5 {offsets = [1, 0, 0], sizes = [16, 16, 64], strides = [1, 1, 1]} : vector<18x18x64xf32> to vector<16x16x64xf32>
    %14 = vector.shape_cast %13 : vector<16x16x64xf32> to vector<256x64xf32>
    %15 = vector.extract_strided_slice %5 {offsets = [1, 1, 0], sizes = [16, 16, 64], strides = [1, 1, 1]} : vector<18x18x64xf32> to vector<16x16x64xf32>
    %16 = vector.shape_cast %15 : vector<16x16x64xf32> to vector<256x64xf32>
    %17 = vector.extract_strided_slice %5 {offsets = [1, 2, 0], sizes = [16, 16, 64], strides = [1, 1, 1]} : vector<18x18x64xf32> to vector<16x16x64xf32>
    %18 = vector.shape_cast %17 : vector<16x16x64xf32> to vector<256x64xf32>
    %19 = vector.extract_strided_slice %5 {offsets = [2, 0, 0], sizes = [16, 16, 64], strides = [1, 1, 1]} : vector<18x18x64xf32> to vector<16x16x64xf32>
    %20 = vector.shape_cast %19 : vector<16x16x64xf32> to vector<256x64xf32>
    %21 = vector.extract_strided_slice %5 {offsets = [2, 1, 0], sizes = [16, 16, 64], strides = [1, 1, 1]} : vector<18x18x64xf32> to vector<16x16x64xf32>
    %22 = vector.shape_cast %21 : vector<16x16x64xf32> to vector<256x64xf32>
    %23 = vector.extract_strided_slice %5 {offsets = [2, 2, 0], sizes = [16, 16, 64], strides = [1, 1, 1]} : vector<18x18x64xf32> to vector<16x16x64xf32>
    %24 = vector.shape_cast %23 : vector<16x16x64xf32> to vector<256x64xf32>
    %25 = tpu.concatenate %8, %10, %12, %14, %16, %18, %20, %22, %24 in 1 : vector<256x64xf32>, vector<256x64xf32>, vector<256x64xf32>, vector<256x64xf32>, vector<256x64xf32>, vector<256x64xf32>, vector<256x64xf32>, vector<256x64xf32>, vector<256x64xf32> -> vector<256x576xf32>
    %26 = arith.truncf %25 : vector<256x576xf32> to vector<256x576xbf16>
    %cst_13 = arith.constant dense<0.000000e+00> : vector<256x64xf32>
    %27 = tpu.matmul %26, %6, %cst_13 {dimension_numbers = #tpu.dot_dimension_numbers<[1], [0], [0], [1], [0, 0, 1, 1], [], []>} : vector<256x576xbf16>, vector<576x64xbf16>, vector<256x64xf32> -> vector<256x64xf32>
    %28 = vector.shape_cast %27 : vector<256x64xf32> to vector<1x16x16x64xf32>
    %c0_14 = arith.constant 0 : index
    %c0_15 = arith.constant 0 : index
    %c0_16 = arith.constant 0 : index
    %c0_17 = arith.constant 0 : index
    %29 = vector.load %arg3[%c0_14, %c0_15, %c0_16, %c0_17] : memref<1x16x16x64xf32, #tpu.memory_space<vmem>>, vector<1x16x16x64xf32>
    tpu.vector_store %arg3[%c0_14, %c0_15, %c0_16, %c0_17], %28 {strides = array<i32>} : memref<1x16x16x64xf32, #tpu.memory_space<vmem>>, vector<1x16x16x64xf32>,
    %cst_18 = arith.constant dense<0.000000e+00> : vector<64xf32>
    %30 = vector.multi_reduction <add>, %27, %cst_18 [0] : vector<256x64xf32> to vector<64xf32>
    %31 = vector.shape_cast %30 : vector<64xf32> to vector<1x1x64xf32>
    %c0_19 = arith.constant 0 : index
    %c0_20 = arith.constant 0 : index
    %c0_21 = arith.constant 0 : index
    %32 = vector.load %arg4[%c0_19, %c0_20, %c0_21] : memref<1x1x64xf32, #tpu.memory_space<vmem>>, vector<1x1x64xf32>
    tpu.vector_store %arg4[%c0_19, %c0_20, %c0_21], %31 {strides = array<i32>} : memref<1x1x64xf32, #tpu.memory_space<vmem>>, vector<1x1x64xf32>,
    %33 = arith.mulf %27, %27 : vector<256x64xf32>
    %cst_22 = arith.constant dense<0.000000e+00> : vector<64xf32>
    %34 = vector.multi_reduction <add>, %33, %cst_22 [0] : vector<256x64xf32> to vector<64xf32>
    %35 = vector.shape_cast %34 : vector<64xf32> to vector<1x1x64xf32>
    %c0_23 = arith.constant 0 : index
    %c0_24 = arith.constant 0 : index
    %c0_25 = arith.constant 0 : index
    %36 = vector.load %arg5[%c0_23, %c0_24, %c0_25] : memref<1x1x64xf32, #tpu.memory_space<vmem>>, vector<1x1x64xf32>
    tpu.vector_store %arg5[%c0_23, %c0_24, %c0_25], %35 {strides = array<i32>} : memref<1x1x64xf32, #tpu.memory_space<vmem>>, vector<1x1x64xf32>,
    return
  }
  func.func @transform_0(%arg0: i32) -> (i32, i32, i32, i32) {
    %c0_i32 = arith.constant 0 : i32
    %c0_i32_0 = arith.constant 0 : i32
    %c0_i32_1 = arith.constant 0 : i32
    %c0_i32_2 = arith.constant 0 : i32
    return %arg0, %c0_i32, %c0_i32_0, %c0_i32_1 : i32, i32, i32, i32
  }
  func.func @transform_1(%arg0: i32) -> (i32, i32) {
    %c0_i32 = arith.constant 0 : i32
    %c0_i32_0 = arith.constant 0 : i32
    %c0_i32_1 = arith.constant 0 : i32
    return %c0_i32, %c0_i32_0 : i32, i32
  }
  func.func @transform_2(%arg0: i32) -> (i32, i32, i32, i32) {
    %c0_i32 = arith.constant 0 : i32
    %c0_i32_0 = arith.constant 0 : i32
    %c0_i32_1 = arith.constant 0 : i32
    %c0_i32_2 = arith.constant 0 : i32
    return %arg0, %c0_i32, %c0_i32_0, %c0_i32_1 : i32, i32, i32, i32
  }
  func.func @transform_3(%arg0: i32) -> (i32, i32, i32) {
    %c0_i32 = arith.constant 0 : i32
    %c0_i32_0 = arith.constant 0 : i32
    %c0_i32_1 = arith.constant 0 : i32
    return %arg0, %c0_i32, %c0_i32_0 : i32, i32, i32
  }
  func.func @transform_4(%arg0: i32) -> (i32, i32, i32) {
    %c0_i32 = arith.constant 0 : i32
    %c0_i32_0 = arith.constant 0 : i32
    %c0_i32_1 = arith.constant 0 : i32
    return %arg0, %c0_i32, %c0_i32_0 : i32, i32, i32
  }
}

</mosaic_0001>

<llo_original>
// kernel: tpu_custom_call.1
$region0: #{tpu_custom_call.1}
  #allocation0 [shape = 'u32[]', space=smem, size = 0x4, offset = 0x4, fixed_abs, tag = 'smem constant byte address 0x4 - core index']
  #allocation1 [shape = 'u32[144,128]{1,0:T(1,128)}', space=vmem, size = 0x12000, scoped, tag = 'internal scratch']
  #allocation2 [shape = 'f32[18,18,64]{2,1,0:T(8,128)}', space=vmem, size = 0x36000, scoped, tag = 'scratch operand']
  %s0 = inlined_call_operand.hbm [shape: f32[2,16,16,64], index: 0, kind: input, shape index: {}]
  %s1 = inlined_call_operand.vmem [shape: bf16[576,64], index: 1, kind: input, shape index: {}]
  %s2 = inlined_call_operand.hbm [shape: f32[2,16,16,64], index: 2, kind: output, shape index: {0}]
  %s3 = inlined_call_operand.hbm [shape: f32[2,1,64], index: 3, kind: output, shape index: {1}]
  %s4 = inlined_call_operand.hbm [shape: f32[2,1,64], index: 4, kind: output, shape index: {2}]
  %5 = xla_tuple %s2, %s3, %s4
  %s6 = sld [smem:[#allocation0]]
  $region61: #{tpu_custom_call.1} parent=0
    _
  %s8 = ssub.s32 1, %s6
  %s9 = scalar_select 0, %s8, %s6
  $region1: #{tpu_custom_call.1} parent=0
    #allocation3 [shape = 'u8[262144]{0}', space=vmem, size = 0x40000, scoped, tag = 'input window, operand 0']
    #allocation4 [shape = 's32[2]{0}', space=sflag, size = 0x8, scoped, tag = 'scoped memory for tpu_custom_call.1']
    #allocation5 [shape = 's32[2]{0}', space=sflag, size = 0x8, scoped, tag = 'scoped memory for tpu_custom_call.1']
    #allocation6 [shape = 'u8[262144]{0}', space=vmem, size = 0x40000, scoped, tag = 'output window, operand 0']
    #allocation7 [shape = 'u8[1024]{0}', space=vmem, size = 0x400, scoped, tag = 'output window, operand 1']
    #allocation8 [shape = 's32[2]{0}', space=sflag, size = 0x8, scoped, tag = 'scoped memory for tpu_custom_call.1']
    #allocation9 [shape = 'u8[1024]{0}', space=vmem, size = 0x400, scoped, tag = 'output window, operand 2']
    %10 = vsyncpa [#allocation4], 0
    %s11 = scalar_lea.sflag [#allocation4], 1
    %12 = vsyncpa %s11, 0
    %13 = vsyncpa [#allocation5], 0
    %s14 = scalar_lea.sflag [#allocation5], 1
    %15 = vsyncpa %s14, 0
    %16 = vsyncpa [#allocation8], 0
    %s17 = scalar_lea.sflag [#allocation8], 1
    %18 = vsyncpa %s17, 0
    loop: start=0, step=1, limit=4
    $region2: #{tpu_custom_call.1} parent=1 // loop_pre_header
      _
    $region3: #{tpu_custom_call.1} parent=1 // loop_header
      %s20 = sphi 0, %s24
      %p21 = scmp.ge.s32.totalorder %s20, 4
      %s30 = sphi 0, %s32
      %s33 = sphi 0, %s30
      %s34 = sphi 0, %s33
      %s50 = sphi 0, %s34
      %s54 = sphi 0, %s54
      %s56 = sphi 0, %s54
      %s57 = sphi 0, %s56
      %s71 = sphi 0, %s57
      %s77 = sphi 0, %s79
      %s80 = sphi 0, %s77
      %s81 = sphi 0, %s80
      %s97 = sphi 0, %s81
      %s103 = sphi 0, %s105
      %s106 = sphi 0, %s103
      %s107 = sphi 0, %s106
      %s123 = sphi 0, %s107
      %s129 = sphi 0, %s131
      %s132 = sphi 0, %s129
      %s133 = sphi 0, %s132
      %s149 = sphi 0, %s133
    $region4: #{tpu_custom_call.1} parent=1 // loop_header_branch
      %23 = sbr.rel (%p21) target = $region8
    $region5: #{tpu_custom_call.1} parent=1 // loop_body
      %s25 = ssub.s32 %s20, 1
      %s26 = ssub.s32 %s20, 2
      %s27 = sadd.s32 %s20, 1
      %s28 = ssub.s32 %s20, %s27
      %p29 = scmp.eq.s32.totalorder %s28, 0
      %s31 = sadd.s32 %s30, 1
      %s32 = scalar_select %p29, %s30, %s31
      %p35 = pneg %p29
      %p36 = scmp.eq.s32.totalorder %s20, 1
      %p37 = por %p35, %p36
      %p38 = scmp.ne.s32.totalorder %s30, %s33
      %p39 = scmp.eq.s32.totalorder %s20, 0
      %p40 = por %p38, %p39
      %p41 = scmp.ne.s32.totalorder %s30, %s33
      %p42 = scmp.eq.s32.totalorder %s25, 1
      %p43 = por %p41, %p42
      %p44 = scmp.ne.s32.totalorder %s33, %s34
      %p45 = scmp.eq.s32.totalorder %s25, 0
      %p46 = por %p44, %p45
      %p47 = scmp.ne.s32.totalorder %s33, %s34
      %p48 = scmp.eq.s32.totalorder %s26, 1
      %p49 = por %p47, %p48
      %p51 = scmp.ne.s32.totalorder %s34, %s50
      %p52 = scmp.eq.s32.totalorder %s26, 0
      %p53 = por %p51, %p52
      %s55 = sadd.s32 %s54, 1
      %p58 = scmp.eq.s32.totalorder %s20, 1
      %p59 = scmp.ne.s32.totalorder %s54, %s56
      %p60 = scmp.eq.s32.totalorder %s20, 0
      %p61 = por %p59, %p60
      %p62 = scmp.ne.s32.totalorder %s54, %s56
      %p63 = scmp.eq.s32.totalorder %s25, 1
      %p64 = por %p62, %p63
      %p65 = scmp.ne.s32.totalorder %s56, %s57
      %p66 = scmp.eq.s32.totalorder %s25, 0
      %p67 = por %p65, %p66
      %p68 = scmp.ne.s32.totalorder %s56, %s57
      %p69 = scmp.eq.s32.totalorder %s26, 1
      %p70 = por %p68, %p69
      %p72 = scmp.ne.s32.totalorder %s57, %s71
      %p73 = scmp.eq.s32.totalorder %s26, 0
      %p74 = por %p72, %p73
      %s75 = ssub.s32 %s20, %s27
      %p76 = scmp.eq.s32.totalorder %s75, 0
      %s78 = sadd.s32 %s77, 1
      %s79 = scalar_select %p76, %s77, %s78
      %p82 = pneg %p76
      %p83 = scmp.eq.s32.totalorder %s20, 1
      %p84 = por %p82, %p83
      %p85 = scmp.ne.s32.totalorder %s77, %s80
      %p86 = scmp.eq.s32.totalorder %s20, 0
      %p87 = por %p85, %p86
      %p88 = scmp.ne.s32.totalorder %s77, %s80
      %p89 = scmp.eq.s32.totalorder %s25, 1
      %p90 = por %p88, %p89
      %p91 = scmp.ne.s32.totalorder %s80, %s81
      %p92 = scmp.eq.s32.totalorder %s25, 0
      %p93 = por %p91, %p92
      %p94 = scmp.ne.s32.totalorder %s80, %s81
      %p95 = scmp.eq.s32.totalorder %s26, 1
      %p96 = por %p94, %p95
      %p98 = scmp.ne.s32.totalorder %s81, %s97
      %p99 = scmp.eq.s32.totalorder %s26, 0
      %p100 = por %p98, %p99
      %s101 = ssub.s32 %s20, %s27
      %p102 = scmp.eq.s32.totalorder %s101, 0
      %s104 = sadd.s32 %s103, 1
      %s105 = scalar_select %p102, %s103, %s104
      %p108 = pneg %p102
      %p109 = scmp.eq.s32.totalorder %s20, 1
      %p110 = por %p108, %p109
      %p111 = scmp.ne.s32.totalorder %s103, %s106
      %p112 = scmp.eq.s32.totalorder %s20, 0
      %p113 = por %p111, %p112
      %p114 = scmp.ne.s32.totalorder %s103, %s106
      %p115 = scmp.eq.s32.totalorder %s25, 1
      %p116 = por %p114, %p115
      %p117 = scmp.ne.s32.totalorder %s106, %s107
      %p118 = scmp.eq.s32.totalorder %s25, 0
      %p119 = por %p117, %p118
      %p120 = scmp.ne.s32.totalorder %s106, %s107
      %p121 = scmp.eq.s32.totalorder %s26, 1
      %p122 = por %p120, %p121
      %p124 = scmp.ne.s32.totalorder %s107, %s123
      %p125 = scmp.eq.s32.totalorder %s26, 0
      %p126 = por %p124, %p125
      %s127 = ssub.s32 %s20, %s27
      %p128 = scmp.eq.s32.totalorder %s127, 0
      %s130 = sadd.s32 %s129, 1
      %s131 = scalar_select %p128, %s129, %s130
      %p134 = pneg %p128
      %p135 = scmp.eq.s32.totalorder %s20, 1
      %p136 = por %p134, %p135
      %p137 = scmp.ne.s32.totalorder %s129, %s132
      %p138 = scmp.eq.s32.totalorder %s20, 0
      %p139 = por %p137, %p138
      %p140 = scmp.ne.s32.totalorder %s129, %s132
      %p141 = scmp.eq.s32.totalorder %s25, 1
      %p142 = por %p140, %p141
      %p143 = scmp.ne.s32.totalorder %s132, %s133
      %p144 = scmp.eq.s32.totalorder %s25, 0
      %p145 = por %p143, %p144
      %p146 = scmp.ne.s32.totalorder %s132, %s133
      %p147 = scmp.eq.s32.totalorder %s26, 1
      %p148 = por %p146, %p147
      %p150 = scmp.ne.s32.totalorder %s133, %s149
      %p151 = scmp.eq.s32.totalorder %s26, 0
      %p152 = por %p150, %p151
      %p153 = scmp.le.s32.totalorder 1, %s20
      %p154 = scmp.lt.s32.totalorder %s20, 3
      %p155 = pnand %p153, %p154
      %p156 = pneg %p155
      // Predicated region
      $region9: #{tpu_custom_call.1} parent=5 // pred_check
        _
      $region10: #{tpu_custom_call.1} parent=5 // pred_check_branch
        %158 = sbr.rel (%p155) target = $region12
      $region11: #{tpu_custom_call.1} parent=5 // pred_region
        %s159 = ssub.s32 %s20, 1
        // Predicated region
        $region13: #{tpu_custom_call.1} parent=11 // pred_check
          %p160 = pneg %p67
        $region14: #{tpu_custom_call.1} parent=11 // pred_check_branch
          %162 = sbr.rel (%p160) target = $region16
        $region15: #{tpu_custom_call.1} parent=11 // pred_region
          _
        $region16: #{tpu_custom_call.1} parent=11 // pred_fallthru
          _
      $region12: #{tpu_custom_call.1} parent=5 // pred_fallthru
        _
      %p163 = scmp.lt.s32.totalorder %s20, 2
      // Predicated region
      $region17: #{tpu_custom_call.1} parent=5 // pred_check
        %p164 = pneg %p163
      $region18: #{tpu_custom_call.1} parent=5 // pred_check_branch
        %166 = sbr.rel (%p164) target = $region20
      $region19: #{tpu_custom_call.1} parent=5 // pred_region
        // Predicated region
        $region21: #{tpu_custom_call.1} parent=19 // pred_check
          %p167 = pneg %p40
        $region22: #{tpu_custom_call.1} parent=19 // pred_check_branch
          %169 = sbr.rel (%p167) target = $region24
        $region23: #{tpu_custom_call.1} parent=19 // pred_region
          %s170 = sand.u32 %s30, 1
          %s171 = scalar_lea.sflag [#allocation4], %s170
          %s172 = sand.u32 %s30, 1
          %s173 = smul.addr %s172, 256
          %s174 = scalar_lea.vmem [#allocation3], %s173
          %s176 = ssub.s32 4096, 4096
          %177 = vsyncadd %s171, %s176
          %s178 = smul.addr %s20, 32
          %s179 = smul.addr %s178, 128
          %s180 = scalar_lea.hbm %s0, %s179
          %s181 = sshll.u32 %s174, 4
          %s182 = int_to_ptr.vmem [resolvable:$true] %s181
          %187 = dma.hbm_to_vmem [thread:$0]  %s180, 4096, %s182, %s171, 128, 128, 8
        $region24: #{tpu_custom_call.1} parent=19 // pred_fallthru
          _
      $region20: #{tpu_custom_call.1} parent=5 // pred_fallthru
        _
      %p188 = scmp.le.s32.totalorder 1, %s20
      %p189 = scmp.lt.s32.totalorder %s20, 3
      %p190 = pnand %p188, %p189
      %p191 = pneg %p190
      // Predicated region
      $region25: #{tpu_custom_call.1} parent=5 // pred_check
        _
      $region26: #{tpu_custom_call.1} parent=5 // pred_check_branch
        %193 = sbr.rel (%p190) target = $region28
      $region27: #{tpu_custom_call.1} parent=5 // pred_region
        %s194 = ssub.s32 %s20, 1
        %s195 = sand.u32 %s33, 1
        %s196 = scalar_lea.sflag [#allocation4], %s195
        %s197 = sand.u32 %s33, 1
        %s198 = smul.addr %s197, 256
        %s199 = scalar_lea.vmem [#allocation3], %s198
        // Predicated region
        $region29: #{tpu_custom_call.1} parent=27 // pred_check
          %p200 = pneg %p46
        $region30: #{tpu_custom_call.1} parent=27 // pred_check_branch
          %202 = sbr.rel (%p200) target = $region32
        $region31: #{tpu_custom_call.1} parent=27 // pred_region
          %203 = dma.done %s196, 4096
        $region32: #{tpu_custom_call.1} parent=27 // pred_fallthru
          _
        %s204 = sand.u32 %s33, 1
        %s205 = scalar_lea.sflag [#allocation4], %s204
        %s206 = sand.u32 %s33, 1
        %s207 = smul.addr %s206, 256
        %s208 = scalar_lea.vmem [#allocation3], %s207
        %p209 = pneg %p46
        %p210 = pneg %p43
        %p211 = pneg %p67
        %p212 = pneg %p64
        %p213 = pneg %p93
        %p214 = pneg %p90
        %s215 = sand.u32 %s80, 1
        %s216 = scalar_lea.sflag [#allocation5], %s215
        %s217 = sand.u32 %s80, 1
        %s218 = smul.addr %s217, 256
        %s219 = scalar_lea.vmem [#allocation6], %s218
        %p220 = pneg %p119
        %p221 = pneg %p116
        %s222 = sand.u32 %s25, 1
        %s223 = scalar_lea.sflag [#allocation8], %s222
        %s224 = sand.u32 %s106, 1
        %s225 = scalar_lea.vmem [#allocation7], %s224
        %p226 = pneg %p145
        %p227 = pneg %p142
        %s228 = sand.u32 %s25, 1
        %s229 = scalar_lea.sflag [#allocation8], %s228
        %s230 = sand.u32 %s132, 1
        %s231 = scalar_lea.vmem [#allocation9], %s230
        %vm233 = vcmask 523264
        %234 = vst.msk [vmem:[#allocation2] sm:$0xff] %vm233, 0.0
        %235 = vst.msk [vmem:[#allocation2 + $0x8] sm:$0xff] %vm233, 0.0
        %vm236 = vcmask 517120
        %237 = vst.msk [vmem:[#allocation2 + $0x10] sm:$0x3] %vm236, 0.0
        %238 = vst.msk [vmem:[#allocation2 + $0x18] sm:$0xff] %vm233, 0.0
        %239 = vst.msk [vmem:[#allocation2 + $0x20] sm:$0xff] %vm233, 0.0
        %240 = vst.msk [vmem:[#allocation2 + $0x28] sm:$0x3] %vm236, 0.0
        %241 = vst.msk [vmem:[#allocation2 + $0x30] sm:$0xff] %vm233, 0.0
        %242 = vst.msk [vmem:[#allocation2 + $0x38] sm:$0xff] %vm233, 0.0
        %243 = vst.msk [vmem:[#allocation2 + $0x40] sm:$0x3] %vm236, 0.0
        %244 = vst.msk [vmem:[#allocation2 + $0x48] sm:$0xff] %vm233, 0.0
        %245 = vst.msk [vmem:[#allocation2 + $0x50] sm:$0xff] %vm233, 0.0
        %246 = vst.msk [vmem:[#allocation2 + $0x58] sm:$0x3] %vm236, 0.0
        %247 = vst.msk [vmem:[#allocation2 + $0x60] sm:$0xff] %vm233, 0.0
        %248 = vst.msk [vmem:[#allocation2 + $0x68] sm:$0xff] %vm233, 0.0
        %249 = vst.msk [vmem:[#allocation2 + $0x70] sm:$0x3] %vm236, 0.0
        %250 = vst.msk [vmem:[#allocation2 + $0x78] sm:$0xff] %vm233, 0.0
        %251 = vst.msk [vmem:[#allocation2 + $0x80] sm:$0xff] %vm233, 0.0
        %252 = vst.msk [vmem:[#allocation2 + $0x88] sm:$0x3] %vm236, 0.0
        %253 = vst.msk [vmem:[#allocation2 + $0x90] sm:$0xff] %vm233, 0.0
        %254 = vst.msk [vmem:[#allocation2 + $0x98] sm:$0xff] %vm233, 0.0
        %255 = vst.msk [vmem:[#allocation2 + $0xa0] sm:$0x3] %vm236, 0.0
        %256 = vst.msk [vmem:[#allocation2 + $0xa8] sm:$0xff] %vm233, 0.0
        %257 = vst.msk [vmem:[#allocation2 + $0xb0] sm:$0xff] %vm233, 0.0
        %258 = vst.msk [vmem:[#allocation2 + $0xb8] sm:$0x3] %vm236, 0.0
        %259 = vst.msk [vmem:[#allocation2 + $0xc0] sm:$0xff] %vm233, 0.0
        %260 = vst.msk [vmem:[#allocation2 + $0xc8] sm:$0xff] %vm233, 0.0
        %261 = vst.msk [vmem:[#allocation2 + $0xd0] sm:$0x3] %vm236, 0.0
        %262 = vst.msk [vmem:[#allocation2 + $0xd8] sm:$0xff] %vm233, 0.0
        %263 = vst.msk [vmem:[#allocation2 + $0xe0] sm:$0xff] %vm233, 0.0
        %264 = vst.msk [vmem:[#allocation2 + $0xe8] sm:$0x3] %vm236, 0.0
        %265 = vst.msk [vmem:[#allocation2 + $0xf0] sm:$0xff] %vm233, 0.0
        %266 = vst.msk [vmem:[#allocation2 + $0xf8] sm:$0xff] %vm233, 0.0
        %267 = vst.msk [vmem:[#allocation2 + $0x100] sm:$0x3] %vm236, 0.0
        %268 = vst.msk [vmem:[#allocation2 + $0x108] sm:$0xff] %vm233, 0.0
        %269 = vst.msk [vmem:[#allocation2 + $0x110] sm:$0xff] %vm233, 0.0
        %270 = vst.msk [vmem:[#allocation2 + $0x118] sm:$0x3] %vm236, 0.0
        %271 = vst.msk [vmem:[#allocation2 + $0x120] sm:$0xff] %vm233, 0.0
        %272 = vst.msk [vmem:[#allocation2 + $0x128] sm:$0xff] %vm233, 0.0
        %273 = vst.msk [vmem:[#allocation2 + $0x130] sm:$0x3] %vm236, 0.0
        %274 = vst.msk [vmem:[#allocation2 + $0x138] sm:$0xff] %vm233, 0.0
        %275 = vst.msk [vmem:[#allocation2 + $0x140] sm:$0xff] %vm233, 0.0
        %276 = vst.msk [vmem:[#allocation2 + $0x148] sm:$0x3] %vm236, 0.0
        %277 = vst.msk [vmem:[#allocation2 + $0x150] sm:$0xff] %vm233, 0.0
        %278 = vst.msk [vmem:[#allocation2 + $0x158] sm:$0xff] %vm233, 0.0
        %279 = vst.msk [vmem:[#allocation2 + $0x160] sm:$0x3] %vm236, 0.0
        %280 = vst.msk [vmem:[#allocation2 + $0x168] sm:$0xff] %vm233, 0.0
        %281 = vst.msk [vmem:[#allocation2 + $0x170] sm:$0xff] %vm233, 0.0
        %282 = vst.msk [vmem:[#allocation2 + $0x178] sm:$0x3] %vm236, 0.0
        %283 = vst.msk [vmem:[#allocation2 + $0x180] sm:$0xff] %vm233, 0.0
        %284 = vst.msk [vmem:[#allocation2 + $0x188] sm:$0xff] %vm233, 0.0
        %285 = vst.msk [vmem:[#allocation2 + $0x190] sm:$0x3] %vm236, 0.0
        %286 = vst.msk [vmem:[#allocation2 + $0x198] sm:$0xff] %vm233, 0.0
        %287 = vst.msk [vmem:[#allocation2 + $0x1a0] sm:$0xff] %vm233, 0.0
        %288 = vst.msk [vmem:[#allocation2 + $0x1a8] sm:$0x3] %vm236, 0.0
        %v289 = vld [vmem:[%s199] sm:$0xff]
        %v290 = vld [vmem:[%s199 + $0x8] sm:$0xff]
        %v291 = vld [vmem:[%s199 + $0x10] sm:$0xff]
        %v292 = vld [vmem:[%s199 + $0x18] sm:$0xff]
        %v293 = vld [vmem:[%s199 + $0x20] sm:$0xff]
        %v294 = vld [vmem:[%s199 + $0x28] sm:$0xff]
        %v295 = vld [vmem:[%s199 + $0x30] sm:$0xff]
        %v296 = vld [vmem:[%s199 + $0x38] sm:$0xff]
        %v297 = vld [vmem:[%s199 + $0x40] sm:$0xff]
        %v298 = vld [vmem:[%s199 + $0x48] sm:$0xff]
        %v299 = vld [vmem:[%s199 + $0x50] sm:$0xff]
        %v300 = vld [vmem:[%s199 + $0x58] sm:$0xff]
        %v301 = vld [vmem:[%s199 + $0x60] sm:$0xff]
        %v302 = vld [vmem:[%s199 + $0x68] sm:$0xff]
        %v303 = vld [vmem:[%s199 + $0x70] sm:$0xff]
        %v304 = vld [vmem:[%s199 + $0x78] sm:$0xff]
        %v305 = vld [vmem:[%s199 + $0x80] sm:$0xff]
        %v306 = vld [vmem:[%s199 + $0x88] sm:$0xff]
        %v307 = vld [vmem:[%s199 + $0x90] sm:$0xff]
        %v308 = vld [vmem:[%s199 + $0x98] sm:$0xff]
        %v309 = vld [vmem:[%s199 + $0xa0] sm:$0xff]
        %v310 = vld [vmem:[%s199 + $0xa8] sm:$0xff]
        %v311 = vld [vmem:[%s199 + $0xb0] sm:$0xff]
        %v312 = vld [vmem:[%s199 + $0xb8] sm:$0xff]
        %v313 = vld [vmem:[%s199 + $0xc0] sm:$0xff]
        %v314 = vld [vmem:[%s199 + $0xc8] sm:$0xff]
        %v315 = vld [vmem:[%s199 + $0xd0] sm:$0xff]
        %v316 = vld [vmem:[%s199 + $0xd8] sm:$0xff]
        %v317 = vld [vmem:[%s199 + $0xe0] sm:$0xff]
        %v318 = vld [vmem:[%s199 + $0xe8] sm:$0xff]
        %v319 = vld [vmem:[%s199 + $0xf0] sm:$0xff]
        %v320 = vld [vmem:[%s199 + $0xf8] sm:$0xff]
        %s321 = scalar_lea.vmem [#allocation2], 24
        %322 = vst.msk [vmem:[%s321 + $0x1] sm:$0xff] %vm233, %v289
        %323 = vst.msk [vmem:[%s321 + $0x9] sm:$0xff] %vm233, %v290
        %324 = vst.msk [vmem:[%s321 + $0x19] sm:$0xff] %vm233, %v291
        %325 = vst.msk [vmem:[%s321 + $0x21] sm:$0xff] %vm233, %v292
        %326 = vst.msk [vmem:[%s321 + $0x31] sm:$0xff] %vm233, %v293
        %327 = vst.msk [vmem:[%s321 + $0x39] sm:$0xff] %vm233, %v294
        %328 = vst.msk [vmem:[%s321 + $0x49] sm:$0xff] %vm233, %v295
        %329 = vst.msk [vmem:[%s321 + $0x51] sm:$0xff] %vm233, %v296
        %330 = vst.msk [vmem:[%s321 + $0x61] sm:$0xff] %vm233, %v297
        %331 = vst.msk [vmem:[%s321 + $0x69] sm:$0xff] %vm233, %v298
        %332 = vst.msk [vmem:[%s321 + $0x79] sm:$0xff] %vm233, %v299
        %333 = vst.msk [vmem:[%s321 + $0x81] sm:$0xff] %vm233, %v300
        %334 = vst.msk [vmem:[%s321 + $0x91] sm:$0xff] %vm233, %v301
        %335 = vst.msk [vmem:[%s321 + $0x99] sm:$0xff] %vm233, %v302
        %336 = vst.msk [vmem:[%s321 + $0xa9] sm:$0xff] %vm233, %v303
        %337 = vst.msk [vmem:[%s321 + $0xb1] sm:$0xff] %vm233, %v304
        %338 = vst.msk [vmem:[%s321 + $0xc1] sm:$0xff] %vm233, %v305
        %339 = vst.msk [vmem:[%s321 + $0xc9] sm:$0xff] %vm233, %v306
        %340 = vst.msk [vmem:[%s321 + $0xd9] sm:$0xff] %vm233, %v307
        %341 = vst.msk [vmem:[%s321 + $0xe1] sm:$0xff] %vm233, %v308
        %342 = vst.msk [vmem:[%s321 + $0xf1] sm:$0xff] %vm233, %v309
        %343 = vst.msk [vmem:[%s321 + $0xf9] sm:$0xff] %vm233, %v310
        %344 = vst.msk [vmem:[%s321 + $0x109] sm:$0xff] %vm233, %v311
        %345 = vst.msk [vmem:[%s321 + $0x111] sm:$0xff] %vm233, %v312
        %346 = vst.msk [vmem:[%s321 + $0x121] sm:$0xff] %vm233, %v313
        %347 = vst.msk [vmem:[%s321 + $0x129] sm:$0xff] %vm233, %v314
        %348 = vst.msk [vmem:[%s321 + $0x139] sm:$0xff] %vm233, %v315
        %349 = vst.msk [vmem:[%s321 + $0x141] sm:$0xff] %vm233, %v316
        %350 = vst.msk [vmem:[%s321 + $0x151] sm:$0xff] %vm233, %v317
        %351 = vst.msk [vmem:[%s321 + $0x159] sm:$0xff] %vm233, %v318
        %352 = vst.msk [vmem:[%s321 + $0x169] sm:$0xff] %vm233, %v319
        %353 = vst.msk [vmem:[%s321 + $0x171] sm:$0xff] %vm233, %v320
        %v354 = vld [vmem:[#allocation2] sm:$0xff]
        %v355 = vld [vmem:[#allocation2 + $0x8] sm:$0xff]
        %v356 = vld [vmem:[#allocation2 + $0x10] sm:$0x3]
        %v357 = vld [vmem:[#allocation2 + $0x18] sm:$0xff]
        %v358 = vld [vmem:[#allocation2 + $0x20] sm:$0xff]
        %v359 = vld [vmem:[#allocation2 + $0x28] sm:$0x3]
        %v360 = vld [vmem:[#allocation2 + $0x30] sm:$0xff]
        %v361 = vld [vmem:[#allocation2 + $0x38] sm:$0xff]
        %v362 = vld [vmem:[#allocation2 + $0x40] sm:$0x3]
        %v363 = vld [vmem:[#allocation2 + $0x48] sm:$0xff]
        %v364 = vld [vmem:[#allocation2 + $0x50] sm:$0xff]
        %v365 = vld [vmem:[#allocation2 + $0x58] sm:$0x3]
        %v366 = vld [vmem:[#allocation2 + $0x60] sm:$0xff]
        %v367 = vld [vmem:[#allocation2 + $0x68] sm:$0xff]
        %v368 = vld [vmem:[#allocation2 + $0x70] sm:$0x3]
        %v369 = vld [vmem:[#allocation2 + $0x78] sm:$0xff]
        %v370 = vld [vmem:[#allocation2 + $0x80] sm:$0xff]
        %v371 = vld [vmem:[#allocation2 + $0x88] sm:$0x3]
        %v372 = vld [vmem:[#allocation2 + $0x90] sm:$0xff]
        %v373 = vld [vmem:[#allocation2 + $0x98] sm:$0xff]
        %v374 = vld [vmem:[#allocation2 + $0xa0] sm:$0x3]
        %v375 = vld [vmem:[#allocation2 + $0xa8] sm:$0xff]
        %v376 = vld [vmem:[#allocation2 + $0xb0] sm:$0xff]
        %v377 = vld [vmem:[#allocation2 + $0xb8] sm:$0x3]
        %v378 = vld [vmem:[#allocation2 + $0xc0] sm:$0xff]
        %v379 = vld [vmem:[#allocation2 + $0xc8] sm:$0xff]
        %v380 = vld [vmem:[#allocation2 + $0xd0] sm:$0x3]
        %v381 = vld [vmem:[#allocation2 + $0xd8] sm:$0xff]
        %v382 = vld [vmem:[#allocation2 + $0xe0] sm:$0xff]
        %v383 = vld [vmem:[#allocation2 + $0xe8] sm:$0x3]
        %v384 = vld [vmem:[#allocation2 + $0xf0] sm:$0xff]
        %v385 = vld [vmem:[#allocation2 + $0xf8] sm:$0xff]
        %v386 = vld [vmem:[#allocation2 + $0x100] sm:$0x3]
        %v387 = vld [vmem:[#allocation2 + $0x108] sm:$0xff]
        %v388 = vld [vmem:[#allocation2 + $0x110] sm:$0xff]
        %v389 = vld [vmem:[#allocation2 + $0x118] sm:$0x3]
        %v390 = vld [vmem:[#allocation2 + $0x120] sm:$0xff]
        %v391 = vld [vmem:[#allocation2 + $0x128] sm:$0xff]
        %v392 = vld [vmem:[#allocation2 + $0x130] sm:$0x3]
        %v393 = vld [vmem:[#allocation2 + $0x138] sm:$0xff]
        %v394 = vld [vmem:[#allocation2 + $0x140] sm:$0xff]
        %v395 = vld [vmem:[#allocation2 + $0x148] sm:$0x3]
        %v396 = vld [vmem:[#allocation2 + $0x150] sm:$0xff]
        %v397 = vld [vmem:[#allocation2 + $0x158] sm:$0xff]
        %v398 = vld [vmem:[#allocation2 + $0x160] sm:$0x3]
        %v399 = vld [vmem:[#allocation2 + $0x168] sm:$0xff]
        %v400 = vld [vmem:[#allocation2 + $0x170] sm:$0xff]
        %v401 = vld [vmem:[#allocation2 + $0x178] sm:$0x3]
        %v402 = vld [vmem:[#allocation2 + $0x180] sm:$0xff]
        %v403 = vld [vmem:[#allocation2 + $0x188] sm:$0xff]
        %v404 = vld [vmem:[#allocation2 + $0x190] sm:$0x3]
        %v405 = vld [vmem:[#allocation2 + $0x198] sm:$0xff]
        %v406 = vld [vmem:[#allocation2 + $0x1a0] sm:$0xff]
        %v407 = vld [vmem:[#allocation2 + $0x1a8] sm:$0x3]
        %v408 = vld [vmem:[%s1] sm:$0xf]
        %v409 = vld [vmem:[%s1 + $0x4] sm:$0xf]
        %v410 = vld [vmem:[%s1 + $0x8] sm:$0xf]
        %v411 = vld [vmem:[%s1 + $0xc] sm:$0xf]
        %v412 = vld [vmem:[%s1 + $0x10] sm:$0xf]
        %v413 = vld [vmem:[%s1 + $0x14] sm:$0xf]
        %v414 = vld [vmem:[%s1 + $0x18] sm:$0xf]
        %v415 = vld [vmem:[%s1 + $0x1c] sm:$0xf]
        %v416 = vld [vmem:[%s1 + $0x20] sm:$0xf]
        %v417 = vld [vmem:[%s1 + $0x24] sm:$0xf]
        %v418 = vld [vmem:[%s1 + $0x28] sm:$0xf]
        %v419 = vld [vmem:[%s1 + $0x2c] sm:$0xf]
        %v420 = vld [vmem:[%s1 + $0x30] sm:$0xf]
        %v421 = vld [vmem:[%s1 + $0x34] sm:$0xf]
        %v422 = vld [vmem:[%s1 + $0x38] sm:$0xf]
        %v423 = vld [vmem:[%s1 + $0x3c] sm:$0xf]
        %v424 = vld [vmem:[%s1 + $0x40] sm:$0xf]
        %v425 = vld [vmem:[%s1 + $0x44] sm:$0xf]
        %v426 = vld [vmem:[%s1 + $0x48] sm:$0xf]
        %v427 = vld [vmem:[%s1 + $0x4c] sm:$0xf]
        %v428 = vld [vmem:[%s1 + $0x50] sm:$0xf]
        %v429 = vld [vmem:[%s1 + $0x54] sm:$0xf]
        %v430 = vld [vmem:[%s1 + $0x58] sm:$0xf]
        %v431 = vld [vmem:[%s1 + $0x5c] sm:$0xf]
        %v432 = vld [vmem:[%s1 + $0x60] sm:$0xf]
        %v433 = vld [vmem:[%s1 + $0x64] sm:$0xf]
        %v434 = vld [vmem:[%s1 + $0x68] sm:$0xf]
        %v435 = vld [vmem:[%s1 + $0x6c] sm:$0xf]
        %v436 = vld [vmem:[%s1 + $0x70] sm:$0xf]
        %v437 = vld [vmem:[%s1 + $0x74] sm:$0xf]
        %v438 = vld [vmem:[%s1 + $0x78] sm:$0xf]
        %v439 = vld [vmem:[%s1 + $0x7c] sm:$0xf]
        %v440 = vld [vmem:[%s1 + $0x80] sm:$0xf]
        %v441 = vld [vmem:[%s1 + $0x84] sm:$0xf]
        %v442 = vld [vmem:[%s1 + $0x88] sm:$0xf]
        %v443 = vld [vmem:[%s1 + $0x8c] sm:$0xf]
        %v444 = vld [vmem:[%s1 + $0x90] sm:$0xf]
        %v445 = vld [vmem:[%s1 + $0x94] sm:$0xf]
        %v446 = vld [vmem:[%s1 + $0x98] sm:$0xf]
        %v447 = vld [vmem:[%s1 + $0x9c] sm:$0xf]
        %v448 = vld [vmem:[%s1 + $0xa0] sm:$0xf]
        %v449 = vld [vmem:[%s1 + $0xa4] sm:$0xf]
        %v450 = vld [vmem:[%s1 + $0xa8] sm:$0xf]
        %v451 = vld [vmem:[%s1 + $0xac] sm:$0xf]
        %v452 = vld [vmem:[%s1 + $0xb0] sm:$0xf]
        %v453 = vld [vmem:[%s1 + $0xb4] sm:$0xf]
        %v454 = vld [vmem:[%s1 + $0xb8] sm:$0xf]
        %v455 = vld [vmem:[%s1 + $0xbc] sm:$0xf]
        %v456 = vld [vmem:[%s1 + $0xc0] sm:$0xf]
        %v457 = vld [vmem:[%s1 + $0xc4] sm:$0xf]
        %v458 = vld [vmem:[%s1 + $0xc8] sm:$0xf]
        %v459 = vld [vmem:[%s1 + $0xcc] sm:$0xf]
        %v460 = vld [vmem:[%s1 + $0xd0] sm:$0xf]
        %v461 = vld [vmem:[%s1 + $0xd4] sm:$0xf]
        %v462 = vld [vmem:[%s1 + $0xd8] sm:$0xf]
        %v463 = vld [vmem:[%s1 + $0xdc] sm:$0xf]
        %v464 = vld [vmem:[%s1 + $0xe0] sm:$0xf]
        %v465 = vld [vmem:[%s1 + $0xe4] sm:$0xf]
        %v466 = vld [vmem:[%s1 + $0xe8] sm:$0xf]
        %v467 = vld [vmem:[%s1 + $0xec] sm:$0xf]
        %v468 = vld [vmem:[%s1 + $0xf0] sm:$0xf]
        %v469 = vld [vmem:[%s1 + $0xf4] sm:$0xf]
        %v470 = vld [vmem:[%s1 + $0xf8] sm:$0xf]
        %v471 = vld [vmem:[%s1 + $0xfc] sm:$0xf]
        %v472 = vld [vmem:[%s1 + $0x100] sm:$0xf]
        %v473 = vld [vmem:[%s1 + $0x104] sm:$0xf]
        %v474 = vld [vmem:[%s1 + $0x108] sm:$0xf]
        %v475 = vld [vmem:[%s1 + $0x10c] sm:$0xf]
        %v476 = vld [vmem:[%s1 + $0x110] sm:$0xf]
        %v477 = vld [vmem:[%s1 + $0x114] sm:$0xf]
        %v478 = vld [vmem:[%s1 + $0x118] sm:$0xf]
        %v479 = vld [vmem:[%s1 + $0x11c] sm:$0xf]
        %vm528 = vcmask 1046528
        %v529 = vrot.slane %v354, 1
        %v530 = vrot.slane %v355, 1
        %v531 = vsel %vm528, %v529, %v530
        %v532 = vrot.slane %v356, 1
        %v533 = vsel %vm528, %v530, %v532
        %v534 = vrot.slane %v357, 1
        %v535 = vrot.slane %v358, 1
        %v536 = vsel %vm528, %v534, %v535
        %v537 = vrot.slane %v359, 1
        %v538 = vsel %vm528, %v535, %v537
        %v539 = vrot.slane %v360, 1
        %v540 = vrot.slane %v361, 1
        %v541 = vsel %vm528, %v539, %v540
        %v542 = vrot.slane %v362, 1
        %v543 = vsel %vm528, %v540, %v542
        %v544 = vrot.slane %v363, 1
        %v545 = vrot.slane %v364, 1
        %v546 = vsel %vm528, %v544, %v545
        %v547 = vrot.slane %v365, 1
        %v548 = vsel %vm528, %v545, %v547
        %v549 = vrot.slane %v366, 1
        %v550 = vrot.slane %v367, 1
        %v551 = vsel %vm528, %v549, %v550
        %v552 = vrot.slane %v368, 1
        %v553 = vsel %vm528, %v550, %v552
        %v554 = vrot.slane %v369, 1
        %v555 = vrot.slane %v370, 1
        %v556 = vsel %vm528, %v554, %v555
        %v557 = vrot.slane %v371, 1
        %v558 = vsel %vm528, %v555, %v557
        %v559 = vrot.slane %v372, 1
        %v560 = vrot.slane %v373, 1
        %v561 = vsel %vm528, %v559, %v560
        %v562 = vrot.slane %v374, 1
        %v563 = vsel %vm528, %v560, %v562
        %v564 = vrot.slane %v375, 1
        %v565 = vrot.slane %v376, 1
        %v566 = vsel %vm528, %v564, %v565
        %v567 = vrot.slane %v377, 1
        %v568 = vsel %vm528, %v565, %v567
        %v569 = vrot.slane %v378, 1
        %v570 = vrot.slane %v379, 1
        %v571 = vsel %vm528, %v569, %v570
        %v572 = vrot.slane %v380, 1
        %v573 = vsel %vm528, %v570, %v572
        %v574 = vrot.slane %v381, 1
        %v575 = vrot.slane %v382, 1
        %v576 = vsel %vm528, %v574, %v575
        %v577 = vrot.slane %v383, 1
        %v578 = vsel %vm528, %v575, %v577
        %v579 = vrot.slane %v384, 1
        %v580 = vrot.slane %v385, 1
        %v581 = vsel %vm528, %v579, %v580
        %v582 = vrot.slane %v386, 1
        %v583 = vsel %vm528, %v580, %v582
        %v584 = vrot.slane %v387, 1
        %v585 = vrot.slane %v388, 1
        %v586 = vsel %vm528, %v584, %v585
        %v587 = vrot.slane %v389, 1
        %v588 = vsel %vm528, %v585, %v587
        %v589 = vrot.slane %v390, 1
        %v590 = vrot.slane %v391, 1
        %v591 = vsel %vm528, %v589, %v590
        %v592 = vrot.slane %v392, 1
        %v593 = vsel %vm528, %v590, %v592
        %v594 = vrot.slane %v393, 1
        %v595 = vrot.slane %v394, 1
        %v596 = vsel %vm528, %v594, %v595
        %v597 = vrot.slane %v395, 1
        %v598 = vsel %vm528, %v595, %v597
        %v599 = vrot.slane %v396, 1
        %v600 = vrot.slane %v397, 1
        %v601 = vsel %vm528, %v599, %v600
        %v602 = vrot.slane %v398, 1
        %v603 = vsel %vm528, %v600, %v602
        %v604 = vrot.slane %v399, 1
        %v605 = vrot.slane %v400, 1
        %v606 = vsel %vm528, %v604, %v605
        %v607 = vrot.slane %v401, 1
        %v608 = vsel %vm528, %v605, %v607
        %vm609 = vcmask 1045504
        %v610 = vrot.slane %v354, 2
        %v611 = vrot.slane %v355, 2
        %v612 = vsel %vm609, %v610, %v611
        %v613 = vrot.slane %v356, 2
        %v614 = vsel %vm609, %v611, %v613
        %v615 = vrot.slane %v357, 2
        %v616 = vrot.slane %v358, 2
        %v617 = vsel %vm609, %v615, %v616
        %v618 = vrot.slane %v359, 2
        %v619 = vsel %vm609, %v616, %v618
        %v620 = vrot.slane %v360, 2
        %v621 = vrot.slane %v361, 2
        %v622 = vsel %vm609, %v620, %v621
        %v623 = vrot.slane %v362, 2
        %v624 = vsel %vm609, %v621, %v623
        %v625 = vrot.slane %v363, 2
        %v626 = vrot.slane %v364, 2
        %v627 = vsel %vm609, %v625, %v626
        %v628 = vrot.slane %v365, 2
        %v629 = vsel %vm609, %v626, %v628
        %v630 = vrot.slane %v366, 2
        %v631 = vrot.slane %v367, 2
        %v632 = vsel %vm609, %v630, %v631
        %v633 = vrot.slane %v368, 2
        %v634 = vsel %vm609, %v631, %v633
        %v635 = vrot.slane %v369, 2
        %v636 = vrot.slane %v370, 2
        %v637 = vsel %vm609, %v635, %v636
        %v638 = vrot.slane %v371, 2
        %v639 = vsel %vm609, %v636, %v638
        %v640 = vrot.slane %v372, 2
        %v641 = vrot.slane %v373, 2
        %v642 = vsel %vm609, %v640, %v641
        %v643 = vrot.slane %v374, 2
        %v644 = vsel %vm609, %v641, %v643
        %v645 = vrot.slane %v375, 2
        %v646 = vrot.slane %v376, 2
        %v647 = vsel %vm609, %v645, %v646
        %v648 = vrot.slane %v377, 2
        %v649 = vsel %vm609, %v646, %v648
        %v650 = vrot.slane %v378, 2
        %v651 = vrot.slane %v379, 2
        %v652 = vsel %vm609, %v650, %v651
        %v653 = vrot.slane %v380, 2
        %v654 = vsel %vm609, %v651, %v653
        %v655 = vrot.slane %v381, 2
        %v656 = vrot.slane %v382, 2
        %v657 = vsel %vm609, %v655, %v656
        %v658 = vrot.slane %v383, 2
        %v659 = vsel %vm609, %v656, %v658
        %v660 = vrot.slane %v384, 2
        %v661 = vrot.slane %v385, 2
        %v662 = vsel %vm609, %v660, %v661
        %v663 = vrot.slane %v386, 2
        %v664 = vsel %vm609, %v661, %v663
        %v665 = vrot.slane %v387, 2
        %v666 = vrot.slane %v388, 2
        %v667 = vsel %vm609, %v665, %v666
        %v668 = vrot.slane %v389, 2
        %v669 = vsel %vm609, %v666, %v668
        %v670 = vrot.slane %v390, 2
        %v671 = vrot.slane %v391, 2
        %v672 = vsel %vm609, %v670, %v671
        %v673 = vrot.slane %v392, 2
        %v674 = vsel %vm609, %v671, %v673
        %v675 = vrot.slane %v393, 2
        %v676 = vrot.slane %v394, 2
        %v677 = vsel %vm609, %v675, %v676
        %v678 = vrot.slane %v395, 2
        %v679 = vsel %vm609, %v676, %v678
        %v680 = vrot.slane %v396, 2
        %v681 = vrot.slane %v397, 2
        %v682 = vsel %vm609, %v680, %v681
        %v683 = vrot.slane %v398, 2
        %v684 = vsel %vm609, %v681, %v683
        %v685 = vrot.slane %v399, 2
        %v686 = vrot.slane %v400, 2
        %v687 = vsel %vm609, %v685, %v686
        %v688 = vrot.slane %v401, 2
        %v689 = vsel %vm609, %v686, %v688
        %v725 = vrot.slane %v402, 1
        %v726 = vrot.slane %v403, 1
        %v727 = vsel %vm528, %v725, %v726
        %v728 = vrot.slane %v404, 1
        %v729 = vsel %vm528, %v726, %v728
        %v762 = vrot.slane %v402, 2
        %v763 = vrot.slane %v403, 2
        %v764 = vsel %vm609, %v762, %v763
        %v765 = vrot.slane %v404, 2
        %v766 = vsel %vm609, %v763, %v765
        %v770 = vrot.slane %v405, 1
        %v771 = vrot.slane %v406, 1
        %v772 = vsel %vm528, %v770, %v771
        %v773 = vrot.slane %v407, 1
        %v774 = vsel %vm528, %v771, %v773
        %v775 = vrot.slane %v405, 2
        %v776 = vrot.slane %v406, 2
        %v777 = vsel %vm609, %v775, %v776
        %v778 = vrot.slane %v407, 2
        %v779 = vsel %vm609, %v776, %v778
        %784 = vrot.lane.b32.xlu0 %v531, 64
        %v785 = vpop.permute.xlu0 %784
        %786 = vrot.lane.b32.xlu0 %v533, 64
        %v787 = vpop.permute.xlu0 %786
        %788 = vrot.lane.b32.xlu0 %v536, 64
        %v789 = vpop.permute.xlu0 %788
        %790 = vrot.lane.b32.xlu0 %v538, 64
        %v791 = vpop.permute.xlu0 %790
        %792 = vrot.lane.b32.xlu0 %v541, 64
        %v793 = vpop.permute.xlu0 %792
        %794 = vrot.lane.b32.xlu0 %v543, 64
        %v795 = vpop.permute.xlu0 %794
        %796 = vrot.lane.b32.xlu0 %v546, 64
        %v797 = vpop.permute.xlu0 %796
        %798 = vrot.lane.b32.xlu0 %v548, 64
        %v799 = vpop.permute.xlu0 %798
        %800 = vrot.lane.b32.xlu0 %v551, 64
        %v801 = vpop.permute.xlu0 %800
        %802 = vrot.lane.b32.xlu0 %v553, 64
        %v803 = vpop.permute.xlu0 %802
        %804 = vrot.lane.b32.xlu0 %v556, 64
        %v805 = vpop.permute.xlu0 %804
        %806 = vrot.lane.b32.xlu0 %v558, 64
        %v807 = vpop.permute.xlu0 %806
        %808 = vrot.lane.b32.xlu0 %v561, 64
        %v809 = vpop.permute.xlu0 %808
        %810 = vrot.lane.b32.xlu0 %v563, 64
        %v811 = vpop.permute.xlu0 %810
        %812 = vrot.lane.b32.xlu0 %v566, 64
        %v813 = vpop.permute.xlu0 %812
        %814 = vrot.lane.b32.xlu0 %v568, 64
        %v815 = vpop.permute.xlu0 %814
        %816 = vrot.lane.b32.xlu0 %v571, 64
        %v817 = vpop.permute.xlu0 %816
        %818 = vrot.lane.b32.xlu0 %v573, 64
        %v819 = vpop.permute.xlu0 %818
        %820 = vrot.lane.b32.xlu0 %v576, 64
        %v821 = vpop.permute.xlu0 %820
        %822 = vrot.lane.b32.xlu0 %v578, 64
        %v823 = vpop.permute.xlu0 %822
        %824 = vrot.lane.b32.xlu0 %v581, 64
        %v825 = vpop.permute.xlu0 %824
        %826 = vrot.lane.b32.xlu0 %v583, 64
        %v827 = vpop.permute.xlu0 %826
        %828 = vrot.lane.b32.xlu0 %v586, 64
        %v829 = vpop.permute.xlu0 %828
        %830 = vrot.lane.b32.xlu0 %v588, 64
        %v831 = vpop.permute.xlu0 %830
        %832 = vrot.lane.b32.xlu0 %v591, 64
        %v833 = vpop.permute.xlu0 %832
        %834 = vrot.lane.b32.xlu0 %v593, 64
        %v835 = vpop.permute.xlu0 %834
        %836 = vrot.lane.b32.xlu0 %v596, 64
        %v837 = vpop.permute.xlu0 %836
        %838 = vrot.lane.b32.xlu0 %v598, 64
        %v839 = vpop.permute.xlu0 %838
        %840 = vrot.lane.b32.xlu0 %v601, 64
        %v841 = vpop.permute.xlu0 %840
        %842 = vrot.lane.b32.xlu0 %v603, 64
        %v843 = vpop.permute.xlu0 %842
        %844 = vrot.lane.b32.xlu0 %v606, 64
        %v845 = vpop.permute.xlu0 %844
        %846 = vrot.lane.b32.xlu0 %v608, 64
        %v847 = vpop.permute.xlu0 %846
        %880 = vrot.lane.b32.xlu0 %v357, 64
        %v881 = vpop.permute.xlu0 %880
        %882 = vrot.lane.b32.xlu0 %v358, 64
        %v883 = vpop.permute.xlu0 %882
        %884 = vrot.lane.b32.xlu0 %v360, 64
        %v885 = vpop.permute.xlu0 %884
        %886 = vrot.lane.b32.xlu0 %v361, 64
        %v887 = vpop.permute.xlu0 %886
        %888 = vrot.lane.b32.xlu0 %v363, 64
        %v889 = vpop.permute.xlu0 %888
        %890 = vrot.lane.b32.xlu0 %v364, 64
        %v891 = vpop.permute.xlu0 %890
        %892 = vrot.lane.b32.xlu0 %v366, 64
        %v893 = vpop.permute.xlu0 %892
        %894 = vrot.lane.b32.xlu0 %v367, 64
        %v895 = vpop.permute.xlu0 %894
        %896 = vrot.lane.b32.xlu0 %v369, 64
        %v897 = vpop.permute.xlu0 %896
        %898 = vrot.lane.b32.xlu0 %v370, 64
        %v899 = vpop.permute.xlu0 %898
        %900 = vrot.lane.b32.xlu0 %v372, 64
        %v901 = vpop.permute.xlu0 %900
        %902 = vrot.lane.b32.xlu0 %v373, 64
        %v903 = vpop.permute.xlu0 %902
        %904 = vrot.lane.b32.xlu0 %v375, 64
        %v905 = vpop.permute.xlu0 %904
        %906 = vrot.lane.b32.xlu0 %v376, 64
        %v907 = vpop.permute.xlu0 %906
        %908 = vrot.lane.b32.xlu0 %v378, 64
        %v909 = vpop.permute.xlu0 %908
        %910 = vrot.lane.b32.xlu0 %v379, 64
        %v911 = vpop.permute.xlu0 %910
        %912 = vrot.lane.b32.xlu0 %v381, 64
        %v913 = vpop.permute.xlu0 %912
        %914 = vrot.lane.b32.xlu0 %v382, 64
        %v915 = vpop.permute.xlu0 %914
        %916 = vrot.lane.b32.xlu0 %v384, 64
        %v917 = vpop.permute.xlu0 %916
        %918 = vrot.lane.b32.xlu0 %v385, 64
        %v919 = vpop.permute.xlu0 %918
        %920 = vrot.lane.b32.xlu0 %v387, 64
        %v921 = vpop.permute.xlu0 %920
        %922 = vrot.lane.b32.xlu0 %v388, 64
        %v923 = vpop.permute.xlu0 %922
        %924 = vrot.lane.b32.xlu0 %v390, 64
        %v925 = vpop.permute.xlu0 %924
        %926 = vrot.lane.b32.xlu0 %v391, 64
        %v927 = vpop.permute.xlu0 %926
        %928 = vrot.lane.b32.xlu0 %v393, 64
        %v929 = vpop.permute.xlu0 %928
        %930 = vrot.lane.b32.xlu0 %v394, 64
        %v931 = vpop.permute.xlu0 %930
        %932 = vrot.lane.b32.xlu0 %v396, 64
        %v933 = vpop.permute.xlu0 %932
        %934 = vrot.lane.b32.xlu0 %v397, 64
        %v935 = vpop.permute.xlu0 %934
        %936 = vrot.lane.b32.xlu0 %v399, 64
        %v937 = vpop.permute.xlu0 %936
        %938 = vrot.lane.b32.xlu0 %v400, 64
        %v939 = vpop.permute.xlu0 %938
        %940 = vrot.lane.b32.xlu0 %v402, 64
        %v941 = vpop.permute.xlu0 %940
        %942 = vrot.lane.b32.xlu0 %v403, 64
        %v943 = vpop.permute.xlu0 %942
        %976 = vrot.lane.b32.xlu0 %v617, 64
        %v977 = vpop.permute.xlu0 %976
        %978 = vrot.lane.b32.xlu0 %v619, 64
        %v979 = vpop.permute.xlu0 %978
        %980 = vrot.lane.b32.xlu0 %v622, 64
        %v981 = vpop.permute.xlu0 %980
        %982 = vrot.lane.b32.xlu0 %v624, 64
        %v983 = vpop.permute.xlu0 %982
        %984 = vrot.lane.b32.xlu0 %v627, 64
        %v985 = vpop.permute.xlu0 %984
        %986 = vrot.lane.b32.xlu0 %v629, 64
        %v987 = vpop.permute.xlu0 %986
        %988 = vrot.lane.b32.xlu0 %v632, 64
        %v989 = vpop.permute.xlu0 %988
        %990 = vrot.lane.b32.xlu0 %v634, 64
        %v991 = vpop.permute.xlu0 %990
        %992 = vrot.lane.b32.xlu0 %v637, 64
        %v993 = vpop.permute.xlu0 %992
        %994 = vrot.lane.b32.xlu0 %v639, 64
        %v995 = vpop.permute.xlu0 %994
        %996 = vrot.lane.b32.xlu0 %v642, 64
        %v997 = vpop.permute.xlu0 %996
        %998 = vrot.lane.b32.xlu0 %v644, 64
        %v999 = vpop.permute.xlu0 %998
        %1000 = vrot.lane.b32.xlu0 %v647, 64
        %v1001 = vpop.permute.xlu0 %1000
        %1002 = vrot.lane.b32.xlu0 %v649, 64
        %v1003 = vpop.permute.xlu0 %1002
        %1004 = vrot.lane.b32.xlu0 %v652, 64
        %v1005 = vpop.permute.xlu0 %1004
        %1006 = vrot.lane.b32.xlu0 %v654, 64
        %v1007 = vpop.permute.xlu0 %1006
        %1008 = vrot.lane.b32.xlu0 %v657, 64
        %v1009 = vpop.permute.xlu0 %1008
        %1010 = vrot.lane.b32.xlu0 %v659, 64
        %v1011 = vpop.permute.xlu0 %1010
        %1012 = vrot.lane.b32.xlu0 %v662, 64
        %v1013 = vpop.permute.xlu0 %1012
        %1014 = vrot.lane.b32.xlu0 %v664, 64
        %v1015 = vpop.permute.xlu0 %1014
        %1016 = vrot.lane.b32.xlu0 %v667, 64
        %v1017 = vpop.permute.xlu0 %1016
        %1018 = vrot.lane.b32.xlu0 %v669, 64
        %v1019 = vpop.permute.xlu0 %1018
        %1020 = vrot.lane.b32.xlu0 %v672, 64
        %v1021 = vpop.permute.xlu0 %1020
        %1022 = vrot.lane.b32.xlu0 %v674, 64
        %v1023 = vpop.permute.xlu0 %1022
        %1024 = vrot.lane.b32.xlu0 %v677, 64
        %v1025 = vpop.permute.xlu0 %1024
        %1026 = vrot.lane.b32.xlu0 %v679, 64
        %v1027 = vpop.permute.xlu0 %1026
        %1028 = vrot.lane.b32.xlu0 %v682, 64
        %v1029 = vpop.permute.xlu0 %1028
        %1030 = vrot.lane.b32.xlu0 %v684, 64
        %v1031 = vpop.permute.xlu0 %1030
        %1032 = vrot.lane.b32.xlu0 %v687, 64
        %v1033 = vpop.permute.xlu0 %1032
        %1034 = vrot.lane.b32.xlu0 %v689, 64
        %v1035 = vpop.permute.xlu0 %1034
        %1036 = vrot.lane.b32.xlu0 %v764, 64
        %v1037 = vpop.permute.xlu0 %1036
        %1038 = vrot.lane.b32.xlu0 %v766, 64
        %v1039 = vpop.permute.xlu0 %1038
        %1072 = vrot.lane.b32.xlu0 %v727, 64
        %v1073 = vpop.permute.xlu0 %1072
        %1074 = vrot.lane.b32.xlu0 %v729, 64
        %v1075 = vpop.permute.xlu0 %1074
        %1076 = vrot.lane.b32.xlu0 %v772, 64
        %v1077 = vpop.permute.xlu0 %1076
        %1078 = vrot.lane.b32.xlu0 %v774, 64
        %v1079 = vpop.permute.xlu0 %1078
        %v1084 = vsel %vm233, %v354, %v785
        %v1085 = vsel %vm233, %v355, %v787
        %v1086 = vsel %vm233, %v357, %v789
        %v1087 = vsel %vm233, %v358, %v791
        %v1088 = vsel %vm233, %v360, %v793
        %v1089 = vsel %vm233, %v361, %v795
        %v1090 = vsel %vm233, %v363, %v797
        %v1091 = vsel %vm233, %v364, %v799
        %v1092 = vsel %vm233, %v366, %v801
        %v1093 = vsel %vm233, %v367, %v803
        %v1094 = vsel %vm233, %v369, %v805
        %v1095 = vsel %vm233, %v370, %v807
        %v1096 = vsel %vm233, %v372, %v809
        %v1097 = vsel %vm233, %v373, %v811
        %v1098 = vsel %vm233, %v375, %v813
        %v1099 = vsel %vm233, %v376, %v815
        %v1100 = vsel %vm233, %v378, %v817
        %v1101 = vsel %vm233, %v379, %v819
        %v1102 = vsel %vm233, %v381, %v821
        %v1103 = vsel %vm233, %v382, %v823
        %v1104 = vsel %vm233, %v384, %v825
        %v1105 = vsel %vm233, %v385, %v827
        %v1106 = vsel %vm233, %v387, %v829
        %v1107 = vsel %vm233, %v388, %v831
        %v1108 = vsel %vm233, %v390, %v833
        %v1109 = vsel %vm233, %v391, %v835
        %v1110 = vsel %vm233, %v393, %v837
        %v1111 = vsel %vm233, %v394, %v839
        %v1112 = vsel %vm233, %v396, %v841
        %v1113 = vsel %vm233, %v397, %v843
        %v1114 = vsel %vm233, %v399, %v845
        %v1115 = vsel %vm233, %v400, %v847
        %v1116 = vsel %vm233, %v612, %v881
        %v1117 = vsel %vm233, %v614, %v883
        %v1118 = vsel %vm233, %v617, %v885
        %v1119 = vsel %vm233, %v619, %v887
        %v1120 = vsel %vm233, %v622, %v889
        %v1121 = vsel %vm233, %v624, %v891
        %v1122 = vsel %vm233, %v627, %v893
        %v1123 = vsel %vm233, %v629, %v895
        %v1124 = vsel %vm233, %v632, %v897
        %v1125 = vsel %vm233, %v634, %v899
        %v1126 = vsel %vm233, %v637, %v901
        %v1127 = vsel %vm233, %v639, %v903
        %v1128 = vsel %vm233, %v642, %v905
        %v1129 = vsel %vm233, %v644, %v907
        %v1130 = vsel %vm233, %v647, %v909
        %v1131 = vsel %vm233, %v649, %v911
        %v1132 = vsel %vm233, %v652, %v913
        %v1133 = vsel %vm233, %v654, %v915
        %v1134 = vsel %vm233, %v657, %v917
        %v1135 = vsel %vm233, %v659, %v919
        %v1136 = vsel %vm233, %v662, %v921
        %v1137 = vsel %vm233, %v664, %v923
        %v1138 = vsel %vm233, %v667, %v925
        %v1139 = vsel %vm233, %v669, %v927
        %v1140 = vsel %vm233, %v672, %v929
        %v1141 = vsel %vm233, %v674, %v931
        %v1142 = vsel %vm233, %v677, %v933
        %v1143 = vsel %vm233, %v679, %v935
        %v1144 = vsel %vm233, %v682, %v937
        %v1145 = vsel %vm233, %v684, %v939
        %v1146 = vsel %vm233, %v687, %v941
        %v1147 = vsel %vm233, %v689, %v943
        %v1148 = vsel %vm233, %v536, %v977
        %v1149 = vsel %vm233, %v538, %v979
        %v1150 = vsel %vm233, %v541, %v981
        %v1151 = vsel %vm233, %v543, %v983
        %v1152 = vsel %vm233, %v546, %v985
        %v1153 = vsel %vm233, %v548, %v987
        %v1154 = vsel %vm233, %v551, %v989
        %v1155 = vsel %vm233, %v553, %v991
        %v1156 = vsel %vm233, %v556, %v993
        %v1157 = vsel %vm233, %v558, %v995
        %v1158 = vsel %vm233, %v561, %v997
        %v1159 = vsel %vm233, %v563, %v999
        %v1160 = vsel %vm233, %v566, %v1001
        %v1161 = vsel %vm233, %v568, %v1003
        %v1162 = vsel %vm233, %v571, %v1005
        %v1163 = vsel %vm233, %v573, %v1007
        %v1164 = vsel %vm233, %v576, %v1009
        %v1165 = vsel %vm233, %v578, %v1011
        %v1166 = vsel %vm233, %v581, %v1013
        %v1167 = vsel %vm233, %v583, %v1015
        %v1168 = vsel %vm233, %v586, %v1017
        %v1169 = vsel %vm233, %v588, %v1019
        %v1170 = vsel %vm233, %v591, %v1021
        %v1171 = vsel %vm233, %v593, %v1023
        %v1172 = vsel %vm233, %v596, %v1025
        %v1173 = vsel %vm233, %v598, %v1027
        %v1174 = vsel %vm233, %v601, %v1029
        %v1175 = vsel %vm233, %v603, %v1031
        %v1176 = vsel %vm233, %v606, %v1033
        %v1177 = vsel %vm233, %v608, %v1035
        %v1178 = vsel %vm233, %v727, %v1037
        %v1179 = vsel %vm233, %v729, %v1039
        %v1180 = vsel %vm233, %v402, %v1073
        %v1181 = vsel %vm233, %v403, %v1075
        %v1182 = vsel %vm233, %v405, %v1077
        %v1183 = vsel %vm233, %v406, %v1079
        %v1184 = vpack.c.bf16 %v1085, %v1084
        %v1185 = vpack.c.bf16 %v1117, %v1116
        %v1186 = vpack.c.bf16 %v1149, %v1148
        %v1187 = vpack.c.bf16 %v1089, %v1088
        %v1188 = vpack.c.bf16 %v624, %v622
        %v1189 = vpack.c.bf16 %v1087, %v1086
        %v1190 = vpack.c.bf16 %v1119, %v1118
        %v1191 = vpack.c.bf16 %v1151, %v1150
        %v1192 = vpack.c.bf16 %v1091, %v1090
        %v1193 = vpack.c.bf16 %v629, %v627
        %v1194 = vpack.c.bf16 %v1121, %v1120
        %v1195 = vpack.c.bf16 %v1153, %v1152
        %v1196 = vpack.c.bf16 %v1093, %v1092
        %v1197 = vpack.c.bf16 %v634, %v632
        %v1198 = vpack.c.bf16 %v1123, %v1122
        %v1199 = vpack.c.bf16 %v1155, %v1154
        %v1200 = vpack.c.bf16 %v1095, %v1094
        %v1201 = vpack.c.bf16 %v639, %v637
        %v1202 = vpack.c.bf16 %v1125, %v1124
        %v1203 = vpack.c.bf16 %v1157, %v1156
        %v1204 = vpack.c.bf16 %v1097, %v1096
        %v1205 = vpack.c.bf16 %v644, %v642
        %v1206 = vpack.c.bf16 %v1127, %v1126
        %v1207 = vpack.c.bf16 %v1159, %v1158
        %v1208 = vpack.c.bf16 %v1099, %v1098
        %v1209 = vpack.c.bf16 %v649, %v647
        %v1210 = vpack.c.bf16 %v1129, %v1128
        %v1211 = vpack.c.bf16 %v1161, %v1160
        %v1212 = vpack.c.bf16 %v1101, %v1100
        %v1213 = vpack.c.bf16 %v654, %v652
        %v1214 = vpack.c.bf16 %v1131, %v1130
        %v1215 = vpack.c.bf16 %v1163, %v1162
        %v1216 = vpack.c.bf16 %v1103, %v1102
        %v1217 = vpack.c.bf16 %v659, %v657
        %v1218 = vpack.c.bf16 %v1133, %v1132
        %v1219 = vpack.c.bf16 %v1165, %v1164
        %v1220 = vpack.c.bf16 %v1105, %v1104
        %v1221 = vpack.c.bf16 %v664, %v662
        %v1222 = vpack.c.bf16 %v1135, %v1134
        %v1223 = vpack.c.bf16 %v1167, %v1166
        %v1224 = vpack.c.bf16 %v1107, %v1106
        %v1225 = vpack.c.bf16 %v669, %v667
        %v1226 = vpack.c.bf16 %v1137, %v1136
        %v1227 = vpack.c.bf16 %v1169, %v1168
        %v1228 = vpack.c.bf16 %v1109, %v1108
        %v1229 = vpack.c.bf16 %v674, %v672
        %v1230 = vpack.c.bf16 %v1139, %v1138
        %v1231 = vpack.c.bf16 %v1171, %v1170
        %v1232 = vpack.c.bf16 %v1111, %v1110
        %v1233 = vpack.c.bf16 %v679, %v677
        %v1234 = vpack.c.bf16 %v1141, %v1140
        %v1235 = vpack.c.bf16 %v1173, %v1172
        %v1236 = vpack.c.bf16 %v1113, %v1112
        %v1237 = vpack.c.bf16 %v684, %v682
        %v1238 = vpack.c.bf16 %v1143, %v1142
        %v1239 = vpack.c.bf16 %v1175, %v1174
        %v1240 = vpack.c.bf16 %v1115, %v1114
        %v1241 = vpack.c.bf16 %v689, %v687
        %v1242 = vpack.c.bf16 %v1145, %v1144
        %v1243 = vpack.c.bf16 %v1177, %v1176
        %v1244 = vpack.c.bf16 %v1181, %v1180
        %v1245 = vpack.c.bf16 %v766, %v764
        %v1246 = vpack.c.bf16 %v1147, %v1146
        %v1247 = vpack.c.bf16 %v1179, %v1178
        %v1248 = vpack.c.bf16 %v1183, %v1182
        %v1249 = vpack.c.bf16 %v779, %v777
        %v1322 = vunpack.c.l.b16 %v408
        %v1323 = vunpack.c.l.b16 %v409
        %v1324 = vunpack.c.l.b16 %v410
        %v1325 = vunpack.c.l.b16 %v411
        %v1326 = vunpack.c.l.b16 %v412
        %v1327 = vunpack.c.l.b16 %v413
        %v1328 = vunpack.c.l.b16 %v414
        %v1329 = vunpack.c.l.b16 %v415
        %v1330 = vunpack.c.l.b16 %v416
        %v1331 = vunpack.c.l.b16 %v417
        %v1332 = vunpack.c.l.b16 %v418
        %v1333 = vunpack.c.l.b16 %v419
        %v1334 = vunpack.c.l.b16 %v420
        %v1335 = vunpack.c.l.b16 %v421
        %v1336 = vunpack.c.l.b16 %v422
        %v1337 = vunpack.c.l.b16 %v423
        %v1338 = vunpack.c.l.b16 %v424
        %v1339 = vunpack.c.l.b16 %v425
        %v1340 = vunpack.c.l.b16 %v426
        %v1341 = vunpack.c.l.b16 %v427
        %v1342 = vunpack.c.l.b16 %v428
        %v1343 = vunpack.c.l.b16 %v429
        %v1344 = vunpack.c.l.b16 %v430
        %v1345 = vunpack.c.l.b16 %v431
        %v1346 = vunpack.c.l.b16 %v432
        %v1347 = vunpack.c.l.b16 %v433
        %v1348 = vunpack.c.l.b16 %v434
        %v1349 = vunpack.c.l.b16 %v435
        %v1350 = vunpack.c.l.b16 %v436
        %v1351 = vunpack.c.l.b16 %v437
        %v1352 = vunpack.c.l.b16 %v438
        %v1353 = vunpack.c.l.b16 %v439
        %v1354 = vunpack.c.l.b16 %v440
        %v1355 = vunpack.c.l.b16 %v441
        %v1356 = vunpack.c.l.b16 %v442
        %v1357 = vunpack.c.l.b16 %v443
        %v1358 = vunpack.c.l.b16 %v444
        %v1359 = vunpack.c.l.b16 %v445
        %v1360 = vunpack.c.l.b16 %v446
        %v1361 = vunpack.c.l.b16 %v447
        %v1362 = vunpack.c.l.b16 %v448
        %v1363 = vunpack.c.l.b16 %v449
        %v1364 = vunpack.c.l.b16 %v450
        %v1365 = vunpack.c.l.b16 %v451
        %v1366 = vunpack.c.l.b16 %v452
        %v1367 = vunpack.c.l.b16 %v453
        %v1368 = vunpack.c.l.b16 %v454
        %v1369 = vunpack.c.l.b16 %v455
        %v1370 = vunpack.c.l.b16 %v456
        %v1371 = vunpack.c.l.b16 %v457
        %v1372 = vunpack.c.l.b16 %v458
        %v1373 = vunpack.c.l.b16 %v459
        %v1374 = vunpack.c.l.b16 %v460
        %v1375 = vunpack.c.l.b16 %v461
        %v1376 = vunpack.c.l.b16 %v462
        %v1377 = vunpack.c.l.b16 %v463
        %v1378 = vunpack.c.l.b16 %v464
        %v1379 = vunpack.c.l.b16 %v465
        %v1380 = vunpack.c.l.b16 %v466
        %v1381 = vunpack.c.l.b16 %v467
        %v1382 = vunpack.c.l.b16 %v468
        %v1383 = vunpack.c.l.b16 %v469
        %v1384 = vunpack.c.l.b16 %v470
        %v1385 = vunpack.c.l.b16 %v471
        %v1386 = vunpack.c.l.b16 %v472
        %v1387 = vunpack.c.l.b16 %v473
        %v1388 = vunpack.c.l.b16 %v474
        %v1389 = vunpack.c.l.b16 %v475
        %v1390 = vunpack.c.l.b16 %v476
        %v1391 = vunpack.c.l.b16 %v477
        %v1392 = vunpack.c.l.b16 %v478
        %v1393 = vunpack.c.l.b16 %v479
        %v1394 = vpack.c.b16 %v1323, %v1322
        %v1395 = vpack.c.b16 %v1325, %v1324
        %v1396 = vpack.c.b16 %v1327, %v1326
        %v1397 = vpack.c.b16 %v1329, %v1328
        %v1398 = vpack.c.b16 %v1331, %v1330
        %v1399 = vpack.c.b16 %v1333, %v1332
        %v1400 = vpack.c.b16 %v1335, %v1334
        %v1401 = vpack.c.b16 %v1337, %v1336
        %v1402 = vpack.c.b16 %v1339, %v1338
        %v1403 = vpack.c.b16 %v1341, %v1340
        %v1404 = vpack.c.b16 %v1343, %v1342
        %v1405 = vpack.c.b16 %v1345, %v1344
        %v1406 = vpack.c.b16 %v1347, %v1346
        %v1407 = vpack.c.b16 %v1349, %v1348
        %v1408 = vpack.c.b16 %v1351, %v1350
        %v1409 = vpack.c.b16 %v1353, %v1352
        %v1410 = vpack.c.b16 %v1355, %v1354
        %v1411 = vpack.c.b16 %v1357, %v1356
        %v1412 = vpack.c.b16 %v1359, %v1358
        %v1413 = vpack.c.b16 %v1361, %v1360
        %v1414 = vpack.c.b16 %v1363, %v1362
        %v1415 = vpack.c.b16 %v1365, %v1364
        %v1416 = vpack.c.b16 %v1367, %v1366
        %v1417 = vpack.c.b16 %v1369, %v1368
        %v1418 = vpack.c.b16 %v1371, %v1370
        %v1419 = vpack.c.b16 %v1373, %v1372
        %v1420 = vpack.c.b16 %v1375, %v1374
        %v1421 = vpack.c.b16 %v1377, %v1376
        %v1422 = vpack.c.b16 %v1379, %v1378
        %v1423 = vpack.c.b16 %v1381, %v1380
        %v1424 = vpack.c.b16 %v1383, %v1382
        %v1425 = vpack.c.b16 %v1385, %v1384
        %v1426 = vpack.c.b16 %v1387, %v1386
        %v1427 = vpack.c.b16 %v1389, %v1388
        %v1428 = vpack.c.b16 %v1391, %v1390
        %v1429 = vpack.c.b16 %v1393, %v1392
        %v1467 = vsel %vm233, %v1188, 0
        %v1470 = vsel %vm233, %v1193, 0
        %v1473 = vsel %vm233, %v1197, 0
        %v1476 = vsel %vm233, %v1201, 0
        %v1479 = vsel %vm233, %v1205, 0
        %v1482 = vsel %vm233, %v1209, 0
        %v1485 = vsel %vm233, %v1213, 0
        %v1488 = vsel %vm233, %v1217, 0
        %v1491 = vsel %vm233, %v1221, 0
        %v1494 = vsel %vm233, %v1225, 0
        %v1497 = vsel %vm233, %v1229, 0
        %v1500 = vsel %vm233, %v1233, 0
        %v1503 = vsel %vm233, %v1237, 0
        %v1506 = vsel %vm233, %v1241, 0
        %v1509 = vsel %vm233, %v1245, 0
        %v1512 = vsel %vm233, %v1249, 0
        %1514 = vmatprep.subr.bf16.mxu0 0
        %1515 = vmatpush1.bf16.msra.mxu0 %v1401
        %1516 = vmatprep.subr.bf16.mxu0 0
        %1517 = vmatpush1.bf16.msra.mxu0 %v1400
        %1518 = vmatprep.subr.bf16.mxu0 0
        %1519 = vmatpush1.bf16.msra.mxu0 %v1399
        %1520 = vmatprep.subr.bf16.mxu0 0
        %1521 = vmatpush1.bf16.msra.mxu0 %v1398
        %1522 = vmatprep.subr.bf16.mxu0 0
        %1523 = vmatpush1.bf16.msra.mxu0 %v1397
        %1524 = vmatprep.subr.bf16.mxu0 0
        %1525 = vmatpush1.bf16.msra.mxu0 %v1396
        %1526 = vmatprep.subr.bf16.mxu0 0
        %1527 = vmatpush1.bf16.msra.mxu0 %v1395
        %1528 = vmatprep.subr.bf16.mxu0 0
        %1529 = vmatpush1.bf16.msra.mxu0 %v1394
        %1530 = vmatprep.subr.bf16.mxu0 0
        %1531 = vmatpush2.bf16.msra.mxu0 %v1409
        %1532 = vmatprep.subr.bf16.mxu0 0
        %1533 = vmatpush2.bf16.msra.mxu0 %v1408
        %1534 = vmatprep.subr.bf16.mxu0 0
        %1535 = vmatpush2.bf16.msra.mxu0 %v1407
        %1536 = vmatprep.subr.bf16.mxu0 0
        %1537 = vmatpush2.bf16.msra.mxu0 %v1406
        %1538 = vmatprep.subr.bf16.mxu0 0
        %1539 = vmatpush2.bf16.msra.mxu0 %v1405
        %1540 = vmatprep.subr.bf16.mxu0 0
        %1541 = vmatpush2.bf16.msra.mxu0 %v1404
        %1542 = vmatprep.subr.bf16.mxu0 0
        %1543 = vmatpush2.bf16.msra.mxu0 %v1403
        %1544 = vmatprep.subr.bf16.mxu0 0
        %1545 = vmatpush2.bf16.msra.mxu0 %v1402
        %1546 = vmatprep.mubr.bf16.mxu0 %v1185
        %1547 = vmatmul.mubr.bf16.gmra.mxu0 %v1184
        %v1548 = vpop.f32.mrf.mxu0
        %v1549 = vadd.f32 0.0, %v1548
        %v1550 = vpop.f32.mrf.mxu0
        %v1551 = vpop.f32.mrf.mxu0
        %v1552 = vadd.f32 0.0, %v1551
        %v1553 = vpop.f32.mrf.mxu0
        %1554 = vmatprep.mubr.bf16.mxu0 %v1190
        %1555 = vmatmul.mubr.bf16.gmra.mxu0 %v1189
        %v1556 = vpop.f32.mrf.mxu0
        %v1557 = vadd.f32 0.0, %v1556
        %v1558 = vpop.f32.mrf.mxu0
        %v1559 = vpop.f32.mrf.mxu0
        %v1560 = vadd.f32 0.0, %v1559
        %v1561 = vpop.f32.mrf.mxu0
        %1562 = vmatprep.mubr.bf16.mxu0 %v1194
        %1563 = vmatmul.mubr.bf16.gmra.mxu0 %v1187
        %v1564 = vpop.f32.mrf.mxu0
        %v1565 = vadd.f32 0.0, %v1564
        %v1566 = vpop.f32.mrf.mxu0
        %v1567 = vpop.f32.mrf.mxu0
        %v1568 = vadd.f32 0.0, %v1567
        %v1569 = vpop.f32.mrf.mxu0
        %1570 = vmatprep.mubr.bf16.mxu0 %v1198
        %1571 = vmatmul.mubr.bf16.gmra.mxu0 %v1192
        %v1572 = vpop.f32.mrf.mxu0
        %v1573 = vadd.f32 0.0, %v1572
        %v1574 = vpop.f32.mrf.mxu0
        %v1575 = vpop.f32.mrf.mxu0
        %v1576 = vadd.f32 0.0, %v1575
        %v1577 = vpop.f32.mrf.mxu0
        %1578 = vmatprep.mubr.bf16.mxu0 %v1202
        %1579 = vmatmul.mubr.bf16.gmra.mxu0 %v1196
        %v1580 = vpop.f32.mrf.mxu0
        %v1581 = vadd.f32 0.0, %v1580
        %v1582 = vpop.f32.mrf.mxu0
        %v1583 = vpop.f32.mrf.mxu0
        %v1584 = vadd.f32 0.0, %v1583
        %v1585 = vpop.f32.mrf.mxu0
        %1586 = vmatprep.mubr.bf16.mxu0 %v1206
        %1587 = vmatmul.mubr.bf16.gmra.mxu0 %v1200
        %v1588 = vpop.f32.mrf.mxu0
        %v1589 = vadd.f32 0.0, %v1588
        %v1590 = vpop.f32.mrf.mxu0
        %v1591 = vpop.f32.mrf.mxu0
        %v1592 = vadd.f32 0.0, %v1591
        %v1593 = vpop.f32.mrf.mxu0
        %1594 = vmatprep.mubr.bf16.mxu0 %v1210
        %1595 = vmatmul.mubr.bf16.gmra.mxu0 %v1204
        %v1596 = vpop.f32.mrf.mxu0
        %v1597 = vadd.f32 0.0, %v1596
        %v1598 = vpop.f32.mrf.mxu0
        %v1599 = vpop.f32.mrf.mxu0
        %v1600 = vadd.f32 0.0, %v1599
        %v1601 = vpop.f32.mrf.mxu0
        %1602 = vmatprep.mubr.bf16.mxu0 %v1214
        %1603 = vmatmul.mubr.bf16.gmra.mxu0 %v1208
        %v1604 = vpop.f32.mrf.mxu0
        %v1605 = vadd.f32 0.0, %v1604
        %v1606 = vpop.f32.mrf.mxu0
        %v1607 = vpop.f32.mrf.mxu0
        %v1608 = vadd.f32 0.0, %v1607
        %v1609 = vpop.f32.mrf.mxu0
        %1610 = vmatprep.mubr.bf16.mxu0 %v1218
        %1611 = vmatmul.mubr.bf16.gmra.mxu0 %v1212
        %v1612 = vpop.f32.mrf.mxu0
        %v1613 = vadd.f32 0.0, %v1612
        %v1614 = vpop.f32.mrf.mxu0
        %v1615 = vpop.f32.mrf.mxu0
        %v1616 = vadd.f32 0.0, %v1615
        %v1617 = vpop.f32.mrf.mxu0
        %1618 = vmatprep.mubr.bf16.mxu0 %v1222
        %1619 = vmatmul.mubr.bf16.gmra.mxu0 %v1216
        %v1620 = vpop.f32.mrf.mxu0
        %v1621 = vadd.f32 0.0, %v1620
        %v1622 = vpop.f32.mrf.mxu0
        %v1623 = vpop.f32.mrf.mxu0
        %v1624 = vadd.f32 0.0, %v1623
        %v1625 = vpop.f32.mrf.mxu0
        %1626 = vmatprep.mubr.bf16.mxu0 %v1226
        %1627 = vmatmul.mubr.bf16.gmra.mxu0 %v1220
        %v1628 = vpop.f32.mrf.mxu0
        %v1629 = vadd.f32 0.0, %v1628
        %v1630 = vpop.f32.mrf.mxu0
        %v1631 = vpop.f32.mrf.mxu0
        %v1632 = vadd.f32 0.0, %v1631
        %v1633 = vpop.f32.mrf.mxu0
        %1634 = vmatprep.mubr.bf16.mxu0 %v1230
        %1635 = vmatmul.mubr.bf16.gmra.mxu0 %v1224
        %v1636 = vpop.f32.mrf.mxu0
        %v1637 = vadd.f32 0.0, %v1636
        %v1638 = vpop.f32.mrf.mxu0
        %v1639 = vpop.f32.mrf.mxu0
        %v1640 = vadd.f32 0.0, %v1639
        %v1641 = vpop.f32.mrf.mxu0
        %1642 = vmatprep.mubr.bf16.mxu0 %v1234
        %1643 = vmatmul.mubr.bf16.gmra.mxu0 %v1228
        %v1644 = vpop.f32.mrf.mxu0
        %v1645 = vadd.f32 0.0, %v1644
        %v1646 = vpop.f32.mrf.mxu0
        %v1647 = vpop.f32.mrf.mxu0
        %v1648 = vadd.f32 0.0, %v1647
        %v1649 = vpop.f32.mrf.mxu0
        %1650 = vmatprep.mubr.bf16.mxu0 %v1238
        %1651 = vmatmul.mubr.bf16.gmra.mxu0 %v1232
        %v1652 = vpop.f32.mrf.mxu0
        %v1653 = vadd.f32 0.0, %v1652
        %v1654 = vpop.f32.mrf.mxu0
        %v1655 = vpop.f32.mrf.mxu0
        %v1656 = vadd.f32 0.0, %v1655
        %v1657 = vpop.f32.mrf.mxu0
        %1658 = vmatprep.mubr.bf16.mxu0 %v1242
        %1659 = vmatmul.mubr.bf16.gmra.mxu0 %v1236
        %v1660 = vpop.f32.mrf.mxu0
        %v1661 = vadd.f32 0.0, %v1660
        %v1662 = vpop.f32.mrf.mxu0
        %v1663 = vpop.f32.mrf.mxu0
        %v1664 = vadd.f32 0.0, %v1663
        %v1665 = vpop.f32.mrf.mxu0
        %1666 = vmatprep.mubr.bf16.mxu0 %v1246
        %1667 = vmatmul.mubr.bf16.gmra.mxu0 %v1240
        %v1668 = vpop.f32.mrf.mxu0
        %v1669 = vadd.f32 0.0, %v1668
        %v1670 = vpop.f32.mrf.mxu0
        %v1671 = vpop.f32.mrf.mxu0
        %v1672 = vadd.f32 0.0, %v1671
        %v1673 = vpop.f32.mrf.mxu0
        %1674 = vdwg.mxu0
        %1675 = vmatprep.subr.bf16.mxu0 0
        %1676 = vmatpush1.bf16.msra.mxu0 %v1417
        %1677 = vmatprep.subr.bf16.mxu0 0
        %1678 = vmatpush1.bf16.msra.mxu0 %v1416
        %1679 = vmatprep.subr.bf16.mxu0 0
        %1680 = vmatpush1.bf16.msra.mxu0 %v1415
        %1681 = vmatprep.subr.bf16.mxu0 0
        %1682 = vmatpush1.bf16.msra.mxu0 %v1414
        %1683 = vmatprep.subr.bf16.mxu0 0
        %1684 = vmatpush1.bf16.msra.mxu0 %v1413
        %1685 = vmatprep.subr.bf16.mxu0 0
        %1686 = vmatpush1.bf16.msra.mxu0 %v1412
        %1687 = vmatprep.subr.bf16.mxu0 0
        %1688 = vmatpush1.bf16.msra.mxu0 %v1411
        %1689 = vmatprep.subr.bf16.mxu0 0
        %1690 = vmatpush1.bf16.msra.mxu0 %v1410
        %1691 = vmatprep.subr.bf16.mxu0 0
        %1692 = vmatpush2.bf16.msra.mxu0 %v1425
        %1693 = vmatprep.subr.bf16.mxu0 0
        %1694 = vmatpush2.bf16.msra.mxu0 %v1424
        %1695 = vmatprep.subr.bf16.mxu0 0
        %1696 = vmatpush2.bf16.msra.mxu0 %v1423
        %1697 = vmatprep.subr.bf16.mxu0 0
        %1698 = vmatpush2.bf16.msra.mxu0 %v1422
        %1699 = vmatprep.subr.bf16.mxu0 0
        %1700 = vmatpush2.bf16.msra.mxu0 %v1421
        %1701 = vmatprep.subr.bf16.mxu0 0
        %1702 = vmatpush2.bf16.msra.mxu0 %v1420
        %1703 = vmatprep.subr.bf16.mxu0 0
        %1704 = vmatpush2.bf16.msra.mxu0 %v1419
        %1705 = vmatprep.subr.bf16.mxu0 0
        %1706 = vmatpush2.bf16.msra.mxu0 %v1418
        %1707 = vmatprep.mubr.bf16.mxu0 %v1187
        %1708 = vmatmul.mubr.bf16.gmra.mxu0 %v1186
        %v1709 = vpop.f32.mrf.mxu0
        %v1710 = vadd.f32 %v1549, %v1709
        %v1711 = vpop.f32.mrf.mxu0
        %v1712 = vpop.f32.mrf.mxu0
        %v1713 = vadd.f32 %v1552, %v1712
        %v1714 = vpop.f32.mrf.mxu0
        %1715 = vmatprep.mubr.bf16.mxu0 %v1192
        %1716 = vmatmul.mubr.bf16.gmra.mxu0 %v1191
        %v1717 = vpop.f32.mrf.mxu0
        %v1718 = vadd.f32 %v1557, %v1717
        %v1719 = vpop.f32.mrf.mxu0
        %v1720 = vpop.f32.mrf.mxu0
        %v1721 = vadd.f32 %v1560, %v1720
        %v1722 = vpop.f32.mrf.mxu0
        %1723 = vmatprep.mubr.bf16.mxu0 %v1196
        %1724 = vmatmul.mubr.bf16.gmra.mxu0 %v1195
        %v1725 = vpop.f32.mrf.mxu0
        %v1726 = vadd.f32 %v1565, %v1725
        %v1727 = vpop.f32.mrf.mxu0
        %v1728 = vpop.f32.mrf.mxu0
        %v1729 = vadd.f32 %v1568, %v1728
        %v1730 = vpop.f32.mrf.mxu0
        %1731 = vmatprep.mubr.bf16.mxu0 %v1200
        %1732 = vmatmul.mubr.bf16.gmra.mxu0 %v1199
        %v1733 = vpop.f32.mrf.mxu0
        %v1734 = vadd.f32 %v1573, %v1733
        %v1735 = vpop.f32.mrf.mxu0
        %v1736 = vpop.f32.mrf.mxu0
        %v1737 = vadd.f32 %v1576, %v1736
        %v1738 = vpop.f32.mrf.mxu0
        %1739 = vmatprep.mubr.bf16.mxu0 %v1204
        %1740 = vmatmul.mubr.bf16.gmra.mxu0 %v1203
        %v1741 = vpop.f32.mrf.mxu0
        %v1742 = vadd.f32 %v1581, %v1741
        %v1743 = vpop.f32.mrf.mxu0
        %v1744 = vpop.f32.mrf.mxu0
        %v1745 = vadd.f32 %v1584, %v1744
        %v1746 = vpop.f32.mrf.mxu0
        %1747 = vmatprep.mubr.bf16.mxu0 %v1208
        %1748 = vmatmul.mubr.bf16.gmra.mxu0 %v1207
        %v1749 = vpop.f32.mrf.mxu0
        %v1750 = vadd.f32 %v1589, %v1749
        %v1751 = vpop.f32.mrf.mxu0
        %v1752 = vpop.f32.mrf.mxu0
        %v1753 = vadd.f32 %v1592, %v1752
        %v1754 = vpop.f32.mrf.mxu0
        %1755 = vmatprep.mubr.bf16.mxu0 %v1212
        %1756 = vmatmul.mubr.bf16.gmra.mxu0 %v1211
        %v1757 = vpop.f32.mrf.mxu0
        %v1758 = vadd.f32 %v1597, %v1757
        %v1759 = vpop.f32.mrf.mxu0
        %v1760 = vpop.f32.mrf.mxu0
        %v1761 = vadd.f32 %v1600, %v1760
        %v1762 = vpop.f32.mrf.mxu0
        %1763 = vmatprep.mubr.bf16.mxu0 %v1216
        %1764 = vmatmul.mubr.bf16.gmra.mxu0 %v1215
        %v1765 = vpop.f32.mrf.mxu0
        %v1766 = vadd.f32 %v1605, %v1765
        %v1767 = vpop.f32.mrf.mxu0
        %v1768 = vpop.f32.mrf.mxu0
        %v1769 = vadd.f32 %v1608, %v1768
        %v1770 = vpop.f32.mrf.mxu0
        %1771 = vmatprep.mubr.bf16.mxu0 %v1220
        %1772 = vmatmul.mubr.bf16.gmra.mxu0 %v1219
        %v1773 = vpop.f32.mrf.mxu0
        %v1774 = vadd.f32 %v1613, %v1773
        %v1775 = vpop.f32.mrf.mxu0
        %v1776 = vpop.f32.mrf.mxu0
        %v1777 = vadd.f32 %v1616, %v1776
        %v1778 = vpop.f32.mrf.mxu0
        %1779 = vmatprep.mubr.bf16.mxu0 %v1224
        %1780 = vmatmul.mubr.bf16.gmra.mxu0 %v1223
        %v1781 = vpop.f32.mrf.mxu0
        %v1782 = vadd.f32 %v1621, %v1781
        %v1783 = vpop.f32.mrf.mxu0
        %v1784 = vpop.f32.mrf.mxu0
        %v1785 = vadd.f32 %v1624, %v1784
        %v1786 = vpop.f32.mrf.mxu0
        %1787 = vmatprep.mubr.bf16.mxu0 %v1228
        %1788 = vmatmul.mubr.bf16.gmra.mxu0 %v1227
        %v1789 = vpop.f32.mrf.mxu0
        %v1790 = vadd.f32 %v1629, %v1789
        %v1791 = vpop.f32.mrf.mxu0
        %v1792 = vpop.f32.mrf.mxu0
        %v1793 = vadd.f32 %v1632, %v1792
        %v1794 = vpop.f32.mrf.mxu0
        %1795 = vmatprep.mubr.bf16.mxu0 %v1232
        %1796 = vmatmul.mubr.bf16.gmra.mxu0 %v1231
        %v1797 = vpop.f32.mrf.mxu0
        %v1798 = vadd.f32 %v1637, %v1797
        %v1799 = vpop.f32.mrf.mxu0
        %v1800 = vpop.f32.mrf.mxu0
        %v1801 = vadd.f32 %v1640, %v1800
        %v1802 = vpop.f32.mrf.mxu0
        %1803 = vmatprep.mubr.bf16.mxu0 %v1236
        %1804 = vmatmul.mubr.bf16.gmra.mxu0 %v1235
        %v1805 = vpop.f32.mrf.mxu0
        %v1806 = vadd.f32 %v1645, %v1805
        %v1807 = vpop.f32.mrf.mxu0
        %v1808 = vpop.f32.mrf.mxu0
        %v1809 = vadd.f32 %v1648, %v1808
        %v1810 = vpop.f32.mrf.mxu0
        %1811 = vmatprep.mubr.bf16.mxu0 %v1240
        %1812 = vmatmul.mubr.bf16.gmra.mxu0 %v1239
        %v1813 = vpop.f32.mrf.mxu0
        %v1814 = vadd.f32 %v1653, %v1813
        %v1815 = vpop.f32.mrf.mxu0
        %v1816 = vpop.f32.mrf.mxu0
        %v1817 = vadd.f32 %v1656, %v1816
        %v1818 = vpop.f32.mrf.mxu0
        %1819 = vmatprep.mubr.bf16.mxu0 %v1244
        %1820 = vmatmul.mubr.bf16.gmra.mxu0 %v1243
        %v1821 = vpop.f32.mrf.mxu0
        %v1822 = vadd.f32 %v1661, %v1821
        %v1823 = vpop.f32.mrf.mxu0
        %v1824 = vpop.f32.mrf.mxu0
        %v1825 = vadd.f32 %v1664, %v1824
        %v1826 = vpop.f32.mrf.mxu0
        %1827 = vmatprep.mubr.bf16.mxu0 %v1248
        %1828 = vmatmul.mubr.bf16.gmra.mxu0 %v1247
        %v1829 = vpop.f32.mrf.mxu0
        %v1830 = vadd.f32 %v1669, %v1829
        %v1831 = vpop.f32.mrf.mxu0
        %v1832 = vpop.f32.mrf.mxu0
        %v1833 = vadd.f32 %v1672, %v1832
        %v1834 = vpop.f32.mrf.mxu0
        %1835 = vdwg.mxu0
        %1836 = vmatprep.subr.bf16.mxu0 0
        %1837 = vmatpush1.bf16.msra.mxu0 0
        %1838 = vmatprep.subr.bf16.mxu0 0
        %1839 = vmatpush1.bf16.msra.mxu0 0
        %1840 = vmatprep.subr.bf16.mxu0 0
        %1841 = vmatpush1.bf16.msra.mxu0 0
        %1842 = vmatprep.subr.bf16.mxu0 0
        %1843 = vmatpush1.bf16.msra.mxu0 0
        %1844 = vmatprep.subr.bf16.mxu0 0
        %1845 = vmatpush1.bf16.msra.mxu0 %v1429
        %1846 = vmatprep.subr.bf16.mxu0 0
        %1847 = vmatpush1.bf16.msra.mxu0 %v1428
        %1848 = vmatprep.subr.bf16.mxu0 0
        %1849 = vmatpush1.bf16.msra.mxu0 %v1427
        %1850 = vmatprep.subr.bf16.mxu0 0
        %1851 = vmatpush1.bf16.msra.mxu0 %v1426
        %1852 = vmatprep.subr.bf16.mxu0 0
        %1853 = vmatpush2.bf16.msra.mxu0 0
        %1854 = vmatprep.subr.bf16.mxu0 0
        %1855 = vmatpush2.bf16.msra.mxu0 0
        %1856 = vmatprep.subr.bf16.mxu0 0
        %1857 = vmatpush2.bf16.msra.mxu0 0
        %1858 = vmatprep.subr.bf16.mxu0 0
        %1859 = vmatpush2.bf16.msra.mxu0 0
        %1860 = vmatprep.subr.bf16.mxu0 0
        %1861 = vmatpush2.bf16.msra.mxu0 0
        %1862 = vmatprep.subr.bf16.mxu0 0
        %1863 = vmatpush2.bf16.msra.mxu0 0
        %1864 = vmatprep.subr.bf16.mxu0 0
        %1865 = vmatpush2.bf16.msra.mxu0 0
        %1866 = vmatprep.subr.bf16.mxu0 0
        %1867 = vmatpush2.bf16.msra.mxu0 0
        %1868 = vmatprep.mubr.bf16.mxu0 0
        %1869 = vmatmul.mubr.bf16.gmra.mxu0 %v1467
        %v1870 = vpop.f32.mrf.mxu0
        %v1871 = vadd.f32 %v1710, %v1870
        %v1872 = vpop.f32.mrf.mxu0
        %v1873 = vpop.f32.mrf.mxu0
        %v1874 = vadd.f32 %v1713, %v1873
        %v1875 = vpop.f32.mrf.mxu0
        %1876 = vmatprep.mubr.bf16.mxu0 0
        %1877 = vmatmul.mubr.bf16.gmra.mxu0 %v1470
        %v1878 = vpop.f32.mrf.mxu0
        %v1879 = vadd.f32 %v1718, %v1878
        %v1880 = vpop.f32.mrf.mxu0
        %v1881 = vpop.f32.mrf.mxu0
        %v1882 = vadd.f32 %v1721, %v1881
        %v1883 = vpop.f32.mrf.mxu0
        %1884 = vmatprep.mubr.bf16.mxu0 0
        %1885 = vmatmul.mubr.bf16.gmra.mxu0 %v1473
        %v1886 = vpop.f32.mrf.mxu0
        %v1887 = vadd.f32 %v1726, %v1886
        %v1888 = vpop.f32.mrf.mxu0
        %v1889 = vpop.f32.mrf.mxu0
        %v1890 = vadd.f32 %v1729, %v1889
        %v1891 = vpop.f32.mrf.mxu0
        %1892 = vmatprep.mubr.bf16.mxu0 0
        %1893 = vmatmul.mubr.bf16.gmra.mxu0 %v1476
        %v1894 = vpop.f32.mrf.mxu0
        %v1895 = vadd.f32 %v1734, %v1894
        %v1896 = vpop.f32.mrf.mxu0
        %v1897 = vpop.f32.mrf.mxu0
        %v1898 = vadd.f32 %v1737, %v1897
        %v1899 = vpop.f32.mrf.mxu0
        %1900 = vmatprep.mubr.bf16.mxu0 0
        %1901 = vmatmul.mubr.bf16.gmra.mxu0 %v1479
        %v1902 = vpop.f32.mrf.mxu0
        %v1903 = vadd.f32 %v1742, %v1902
        %v1904 = vpop.f32.mrf.mxu0
        %v1905 = vpop.f32.mrf.mxu0
        %v1906 = vadd.f32 %v1745, %v1905
        %v1907 = vpop.f32.mrf.mxu0
        %1908 = vmatprep.mubr.bf16.mxu0 0
        %1909 = vmatmul.mubr.bf16.gmra.mxu0 %v1482
        %v1910 = vpop.f32.mrf.mxu0
        %v1911 = vadd.f32 %v1750, %v1910
        %v1912 = vpop.f32.mrf.mxu0
        %v1913 = vpop.f32.mrf.mxu0
        %v1914 = vadd.f32 %v1753, %v1913
        %v1915 = vpop.f32.mrf.mxu0
        %1916 = vmatprep.mubr.bf16.mxu0 0
        %1917 = vmatmul.mubr.bf16.gmra.mxu0 %v1485
        %v1918 = vpop.f32.mrf.mxu0
        %v1919 = vadd.f32 %v1758, %v1918
        %v1920 = vpop.f32.mrf.mxu0
        %v1921 = vpop.f32.mrf.mxu0
        %v1922 = vadd.f32 %v1761, %v1921
        %v1923 = vpop.f32.mrf.mxu0
        %1924 = vmatprep.mubr.bf16.mxu0 0
        %1925 = vmatmul.mubr.bf16.gmra.mxu0 %v1488
        %v1926 = vpop.f32.mrf.mxu0
        %v1927 = vadd.f32 %v1766, %v1926
        %v1928 = vpop.f32.mrf.mxu0
        %v1929 = vpop.f32.mrf.mxu0
        %v1930 = vadd.f32 %v1769, %v1929
        %v1931 = vpop.f32.mrf.mxu0
        %1932 = vmatprep.mubr.bf16.mxu0 0
        %1933 = vmatmul.mubr.bf16.gmra.mxu0 %v1491
        %v1934 = vpop.f32.mrf.mxu0
        %v1935 = vadd.f32 %v1774, %v1934
        %v1936 = vpop.f32.mrf.mxu0
        %v1937 = vpop.f32.mrf.mxu0
        %v1938 = vadd.f32 %v1777, %v1937
        %v1939 = vpop.f32.mrf.mxu0
        %1940 = vmatprep.mubr.bf16.mxu0 0
        %1941 = vmatmul.mubr.bf16.gmra.mxu0 %v1494
        %v1942 = vpop.f32.mrf.mxu0
        %v1943 = vadd.f32 %v1782, %v1942
        %v1944 = vpop.f32.mrf.mxu0
        %v1945 = vpop.f32.mrf.mxu0
        %v1946 = vadd.f32 %v1785, %v1945
        %v1947 = vpop.f32.mrf.mxu0
        %1948 = vmatprep.mubr.bf16.mxu0 0
        %1949 = vmatmul.mubr.bf16.gmra.mxu0 %v1497
        %v1950 = vpop.f32.mrf.mxu0
        %v1951 = vadd.f32 %v1790, %v1950
        %v1952 = vpop.f32.mrf.mxu0
        %v1953 = vpop.f32.mrf.mxu0
        %v1954 = vadd.f32 %v1793, %v1953
        %v1955 = vpop.f32.mrf.mxu0
        %1956 = vmatprep.mubr.bf16.mxu0 0
        %1957 = vmatmul.mubr.bf16.gmra.mxu0 %v1500
        %v1958 = vpop.f32.mrf.mxu0
        %v1959 = vadd.f32 %v1798, %v1958
        %v1960 = vpop.f32.mrf.mxu0
        %v1961 = vpop.f32.mrf.mxu0
        %v1962 = vadd.f32 %v1801, %v1961
        %v1963 = vpop.f32.mrf.mxu0
        %1964 = vmatprep.mubr.bf16.mxu0 0
        %1965 = vmatmul.mubr.bf16.gmra.mxu0 %v1503
        %v1966 = vpop.f32.mrf.mxu0
        %v1967 = vadd.f32 %v1806, %v1966
        %v1968 = vpop.f32.mrf.mxu0
        %v1969 = vpop.f32.mrf.mxu0
        %v1970 = vadd.f32 %v1809, %v1969
        %v1971 = vpop.f32.mrf.mxu0
        %1972 = vmatprep.mubr.bf16.mxu0 0
        %1973 = vmatmul.mubr.bf16.gmra.mxu0 %v1506
        %v1974 = vpop.f32.mrf.mxu0
        %v1975 = vadd.f32 %v1814, %v1974
        %v1976 = vpop.f32.mrf.mxu0
        %v1977 = vpop.f32.mrf.mxu0
        %v1978 = vadd.f32 %v1817, %v1977
        %v1979 = vpop.f32.mrf.mxu0
        %1980 = vmatprep.mubr.bf16.mxu0 0
        %1981 = vmatmul.mubr.bf16.gmra.mxu0 %v1509
        %v1982 = vpop.f32.mrf.mxu0
        %v1983 = vadd.f32 %v1822, %v1982
        %v1984 = vpop.f32.mrf.mxu0
        %v1985 = vpop.f32.mrf.mxu0
        %v1986 = vadd.f32 %v1825, %v1985
        %v1987 = vpop.f32.mrf.mxu0
        %1988 = vmatprep.mubr.bf16.mxu0 0
        %1989 = vmatmul.mubr.bf16.gmra.mxu0 %v1512
        %v1990 = vpop.f32.mrf.mxu0
        %v1991 = vadd.f32 %v1830, %v1990
        %v1992 = vpop.f32.mrf.mxu0
        %v1993 = vpop.f32.mrf.mxu0
        %v1994 = vadd.f32 %v1833, %v1993
        %v1995 = vpop.f32.mrf.mxu0
        %1996 = vdwg.mxu0
        %1997 = vst.msk [vmem:[%s219] sm:$0xff] %vm233, %v1871
        %1998 = vst.msk [vmem:[%s219 + $0x8] sm:$0xff] %vm233, %v1874
        %1999 = vst.msk [vmem:[%s219 + $0x10] sm:$0xff] %vm233, %v1879
        %2000 = vst.msk [vmem:[%s219 + $0x18] sm:$0xff] %vm233, %v1882
        %2001 = vst.msk [vmem:[%s219 + $0x20] sm:$0xff] %vm233, %v1887
        %2002 = vst.msk [vmem:[%s219 + $0x28] sm:$0xff] %vm233, %v1890
        %2003 = vst.msk [vmem:[%s219 + $0x30] sm:$0xff] %vm233, %v1895
        %2004 = vst.msk [vmem:[%s219 + $0x38] sm:$0xff] %vm233, %v1898
        %2005 = vst.msk [vmem:[%s219 + $0x40] sm:$0xff] %vm233, %v1903
        %2006 = vst.msk [vmem:[%s219 + $0x48] sm:$0xff] %vm233, %v1906
        %2007 = vst.msk [vmem:[%s219 + $0x50] sm:$0xff] %vm233, %v1911
        %2008 = vst.msk [vmem:[%s219 + $0x58] sm:$0xff] %vm233, %v1914
        %2009 = vst.msk [vmem:[%s219 + $0x60] sm:$0xff] %vm233, %v1919
        %2010 = vst.msk [vmem:[%s219 + $0x68] sm:$0xff] %vm233, %v1922
        %2011 = vst.msk [vmem:[%s219 + $0x70] sm:$0xff] %vm233, %v1927
        %2012 = vst.msk [vmem:[%s219 + $0x78] sm:$0xff] %vm233, %v1930
        %2013 = vst.msk [vmem:[%s219 + $0x80] sm:$0xff] %vm233, %v1935
        %2014 = vst.msk [vmem:[%s219 + $0x88] sm:$0xff] %vm233, %v1938
        %2015 = vst.msk [vmem:[%s219 + $0x90] sm:$0xff] %vm233, %v1943
        %2016 = vst.msk [vmem:[%s219 + $0x98] sm:$0xff] %vm233, %v1946
        %2017 = vst.msk [vmem:[%s219 + $0xa0] sm:$0xff] %vm233, %v1951
        %2018 = vst.msk [vmem:[%s219 + $0xa8] sm:$0xff] %vm233, %v1954
        %2019 = vst.msk [vmem:[%s219 + $0xb0] sm:$0xff] %vm233, %v1959
        %2020 = vst.msk [vmem:[%s219 + $0xb8] sm:$0xff] %vm233, %v1962
        %2021 = vst.msk [vmem:[%s219 + $0xc0] sm:$0xff] %vm233, %v1967
        %2022 = vst.msk [vmem:[%s219 + $0xc8] sm:$0xff] %vm233, %v1970
        %2023 = vst.msk [vmem:[%s219 + $0xd0] sm:$0xff] %vm233, %v1975
        %2024 = vst.msk [vmem:[%s219 + $0xd8] sm:$0xff] %vm233, %v1978
        %2025 = vst.msk [vmem:[%s219 + $0xe0] sm:$0xff] %vm233, %v1983
        %2026 = vst.msk [vmem:[%s219 + $0xe8] sm:$0xff] %vm233, %v1986
        %2027 = vst.msk [vmem:[%s219 + $0xf0] sm:$0xff] %vm233, %v1991
        %2028 = vst.msk [vmem:[%s219 + $0xf8] sm:$0xff] %vm233, %v1994
        %v2029 = vsel %vm233, %v1871, 0.0
        %v2030 = vsel %vm233, %v1874, 0.0
        %v2031 = vadd.f32 %v2029, %v2030
        %v2032 = vsel %vm233, %v1879, 0.0
        %v2033 = vadd.f32 %v2031, %v2032
        %v2034 = vsel %vm233, %v1882, 0.0
        %v2035 = vadd.f32 %v2033, %v2034
        %v2036 = vsel %vm233, %v1887, 0.0
        %v2037 = vadd.f32 %v2035, %v2036
        %v2038 = vsel %vm233, %v1890, 0.0
        %v2039 = vadd.f32 %v2037, %v2038
        %v2040 = vsel %vm233, %v1895, 0.0
        %v2041 = vadd.f32 %v2039, %v2040
        %v2042 = vsel %vm233, %v1898, 0.0
        %v2043 = vadd.f32 %v2041, %v2042
        %v2044 = vsel %vm233, %v1903, 0.0
        %v2045 = vadd.f32 %v2043, %v2044
        %v2046 = vsel %vm233, %v1906, 0.0
        %v2047 = vadd.f32 %v2045, %v2046
        %v2048 = vsel %vm233, %v1911, 0.0
        %v2049 = vadd.f32 %v2047, %v2048
        %v2050 = vsel %vm233, %v1914, 0.0
        %v2051 = vadd.f32 %v2049, %v2050
        %v2052 = vsel %vm233, %v1919, 0.0
        %v2053 = vadd.f32 %v2051, %v2052
        %v2054 = vsel %vm233, %v1922, 0.0
        %v2055 = vadd.f32 %v2053, %v2054
        %v2056 = vsel %vm233, %v1927, 0.0
        %v2057 = vadd.f32 %v2055, %v2056
        %v2058 = vsel %vm233, %v1930, 0.0
        %v2059 = vadd.f32 %v2057, %v2058
        %v2060 = vsel %vm233, %v1935, 0.0
        %v2061 = vadd.f32 %v2059, %v2060
        %v2062 = vsel %vm233, %v1938, 0.0
        %v2063 = vadd.f32 %v2061, %v2062
        %v2064 = vsel %vm233, %v1943, 0.0
        %v2065 = vadd.f32 %v2063, %v2064
        %v2066 = vsel %vm233, %v1946, 0.0
        %v2067 = vadd.f32 %v2065, %v2066
        %v2068 = vsel %vm233, %v1951, 0.0
        %v2069 = vadd.f32 %v2067, %v2068
        %v2070 = vsel %vm233, %v1954, 0.0
        %v2071 = vadd.f32 %v2069, %v2070
        %v2072 = vsel %vm233, %v1959, 0.0
        %v2073 = vadd.f32 %v2071, %v2072
        %v2074 = vsel %vm233, %v1962, 0.0
        %v2075 = vadd.f32 %v2073, %v2074
        %v2076 = vsel %vm233, %v1967, 0.0
        %v2077 = vadd.f32 %v2075, %v2076
        %v2078 = vsel %vm233, %v1970, 0.0
        %v2079 = vadd.f32 %v2077, %v2078
        %v2080 = vsel %vm233, %v1975, 0.0
        %v2081 = vadd.f32 %v2079, %v2080
        %v2082 = vsel %vm233, %v1978, 0.0
        %v2083 = vadd.f32 %v2081, %v2082
        %v2084 = vsel %vm233, %v1983, 0.0
        %v2085 = vadd.f32 %v2083, %v2084
        %v2086 = vsel %vm233, %v1986, 0.0
        %v2087 = vadd.f32 %v2085, %v2086
        %v2088 = vsel %vm233, %v1991, 0.0
        %v2089 = vadd.f32 %v2087, %v2088
        %v2090 = vsel %vm233, %v1994, 0.0
        %v2091 = vadd.f32 %v2089, %v2090
        %v2092 = vrot.slane %v2091, 4
        %v2093 = vadd.f32 %v2091, %v2092
        %v2094 = vrot.slane %v2093, 2
        %v2095 = vadd.f32 %v2093, %v2094
        %v2096 = vrot.slane %v2095, 1
        %v2097 = vadd.f32 %v2095, %v2096
        %vm2098 = vcmask 516096
        %2099 = vst.msk [vmem:[%s225] sm:$0x1] %vm2098, %v2097
        %v2100 = vmul.f32 %v1871, %v1871
        %v2101 = vmul.f32 %v1874, %v1874
        %v2102 = vmul.f32 %v1879, %v1879
        %v2103 = vmul.f32 %v1882, %v1882
        %v2104 = vmul.f32 %v1887, %v1887
        %v2105 = vmul.f32 %v1890, %v1890
        %v2106 = vmul.f32 %v1895, %v1895
        %v2107 = vmul.f32 %v1898, %v1898
        %v2108 = vmul.f32 %v1903, %v1903
        %v2109 = vmul.f32 %v1906, %v1906
        %v2110 = vmul.f32 %v1911, %v1911
        %v2111 = vmul.f32 %v1914, %v1914
        %v2112 = vmul.f32 %v1919, %v1919
        %v2113 = vmul.f32 %v1922, %v1922
        %v2114 = vmul.f32 %v1927, %v1927
        %v2115 = vmul.f32 %v1930, %v1930
        %v2116 = vmul.f32 %v1935, %v1935
        %v2117 = vmul.f32 %v1938, %v1938
        %v2118 = vmul.f32 %v1943, %v1943
        %v2119 = vmul.f32 %v1946, %v1946
        %v2120 = vmul.f32 %v1951, %v1951
        %v2121 = vmul.f32 %v1954, %v1954
        %v2122 = vmul.f32 %v1959, %v1959
        %v2123 = vmul.f32 %v1962, %v1962
        %v2124 = vmul.f32 %v1967, %v1967
        %v2125 = vmul.f32 %v1970, %v1970
        %v2126 = vmul.f32 %v1975, %v1975
        %v2127 = vmul.f32 %v1978, %v1978
        %v2128 = vmul.f32 %v1983, %v1983
        %v2129 = vmul.f32 %v1986, %v1986
        %v2130 = vmul.f32 %v1991, %v1991
        %v2131 = vmul.f32 %v1994, %v1994
        %v2132 = vsel %vm233, %v2100, 0.0
        %v2133 = vsel %vm233, %v2101, 0.0
        %v2134 = vadd.f32 %v2132, %v2133
        %v2135 = vsel %vm233, %v2102, 0.0
        %v2136 = vadd.f32 %v2134, %v2135
        %v2137 = vsel %vm233, %v2103, 0.0
        %v2138 = vadd.f32 %v2136, %v2137
        %v2139 = vsel %vm233, %v2104, 0.0
        %v2140 = vadd.f32 %v2138, %v2139
        %v2141 = vsel %vm233, %v2105, 0.0
        %v2142 = vadd.f32 %v2140, %v2141
        %v2143 = vsel %vm233, %v2106, 0.0
        %v2144 = vadd.f32 %v2142, %v2143
        %v2145 = vsel %vm233, %v2107, 0.0
        %v2146 = vadd.f32 %v2144, %v2145
        %v2147 = vsel %vm233, %v2108, 0.0
        %v2148 = vadd.f32 %v2146, %v2147
        %v2149 = vsel %vm233, %v2109, 0.0
        %v2150 = vadd.f32 %v2148, %v2149
        %v2151 = vsel %vm233, %v2110, 0.0
        %v2152 = vadd.f32 %v2150, %v2151
        %v2153 = vsel %vm233, %v2111, 0.0
        %v2154 = vadd.f32 %v2152, %v2153
        %v2155 = vsel %vm233, %v2112, 0.0
        %v2156 = vadd.f32 %v2154, %v2155
        %v2157 = vsel %vm233, %v2113, 0.0
        %v2158 = vadd.f32 %v2156, %v2157
        %v2159 = vsel %vm233, %v2114, 0.0
        %v2160 = vadd.f32 %v2158, %v2159
        %v2161 = vsel %vm233, %v2115, 0.0
        %v2162 = vadd.f32 %v2160, %v2161
        %v2163 = vsel %vm233, %v2116, 0.0
        %v2164 = vadd.f32 %v2162, %v2163
        %v2165 = vsel %vm233, %v2117, 0.0
        %v2166 = vadd.f32 %v2164, %v2165
        %v2167 = vsel %vm233, %v2118, 0.0
        %v2168 = vadd.f32 %v2166, %v2167
        %v2169 = vsel %vm233, %v2119, 0.0
        %v2170 = vadd.f32 %v2168, %v2169
        %v2171 = vsel %vm233, %v2120, 0.0
        %v2172 = vadd.f32 %v2170, %v2171
        %v2173 = vsel %vm233, %v2121, 0.0
        %v2174 = vadd.f32 %v2172, %v2173
        %v2175 = vsel %vm233, %v2122, 0.0
        %v2176 = vadd.f32 %v2174, %v2175
        %v2177 = vsel %vm233, %v2123, 0.0
        %v2178 = vadd.f32 %v2176, %v2177
        %v2179 = vsel %vm233, %v2124, 0.0
        %v2180 = vadd.f32 %v2178, %v2179
        %v2181 = vsel %vm233, %v2125, 0.0
        %v2182 = vadd.f32 %v2180, %v2181
        %v2183 = vsel %vm233, %v2126, 0.0
        %v2184 = vadd.f32 %v2182, %v2183
        %v2185 = vsel %vm233, %v2127, 0.0
        %v2186 = vadd.f32 %v2184, %v2185
        %v2187 = vsel %vm233, %v2128, 0.0
        %v2188 = vadd.f32 %v2186, %v2187
        %v2189 = vsel %vm233, %v2129, 0.0
        %v2190 = vadd.f32 %v2188, %v2189
        %v2191 = vsel %vm233, %v2130, 0.0
        %v2192 = vadd.f32 %v2190, %v2191
        %v2193 = vsel %vm233, %v2131, 0.0
        %v2194 = vadd.f32 %v2192, %v2193
        %v2195 = vrot.slane %v2194, 4
        %v2196 = vadd.f32 %v2194, %v2195
        %v2197 = vrot.slane %v2196, 2
        %v2198 = vadd.f32 %v2196, %v2197
        %v2199 = vrot.slane %v2198, 1
        %v2200 = vadd.f32 %v2198, %v2199
        %2201 = vst.msk [vmem:[%s231] sm:$0x1] %vm2098, %v2200
        %s2202 = sand.u32 %s80, 1
        %s2203 = scalar_lea.sflag [#allocation5], %s2202
        %s2204 = sand.u32 %s80, 1
        %s2205 = smul.addr %s2204, 256
        %s2206 = scalar_lea.vmem [#allocation6], %s2205
        %s2207 = sand.u32 %s25, 1
        %s2208 = scalar_lea.sflag [#allocation8], %s2207
        %s2209 = sand.u32 %s106, 1
        %s2210 = scalar_lea.vmem [#allocation7], %s2209
        %s2211 = sand.u32 %s25, 1
        %s2212 = scalar_lea.sflag [#allocation8], %s2211
        %s2213 = sand.u32 %s132, 1
        %s2214 = scalar_lea.vmem [#allocation9], %s2213
        // Predicated region
        $region33: #{tpu_custom_call.1} parent=27 // pred_check
          %p2215 = pneg %p90
        $region34: #{tpu_custom_call.1} parent=27 // pred_check_branch
          %2217 = sbr.rel (%p2215) target = $region36
        $region35: #{tpu_custom_call.1} parent=27 // pred_region
          %s2219 = ssub.s32 4096, 4096
          %2220 = vsyncadd %s2203, %s2219
          %s2221 = smul.addr %s25, 32
          %s2222 = smul.addr %s2221, 128
          %s2223 = scalar_lea.hbm %s2, %s2222
          %s2224 = sshll.u32 %s2206, 4
          %s2225 = int_to_ptr.vmem [resolvable:$true] %s2224
          %2230 = dma.vmem_to_hbm [thread:$0]  %s2225, 4096, %s2223, %s2203, 128, 128, 8
        $region36: #{tpu_custom_call.1} parent=27 // pred_fallthru
          _
        // Predicated region
        $region37: #{tpu_custom_call.1} parent=27 // pred_check
          %p2231 = pneg %p116
        $region38: #{tpu_custom_call.1} parent=27 // pred_check_branch
          %2233 = sbr.rel (%p2231) target = $region40
        $region39: #{tpu_custom_call.1} parent=27 // pred_region
          %s2235 = ssub.s32 16, 16
          %2236 = vsyncadd %s2208, %s2235
          %s2237 = smul.addr %s25, 16
          %s2238 = scalar_lea.hbm %s3, %s2237
          %s2240 = sshll.u32 %s2210, 4
          %s2241 = int_to_ptr.vmem [resolvable:$true] %s2240
          %2243 = dma.vmem_to_hbm [thread:$0]  %s2241, 16, %s2238, %s2208
        $region40: #{tpu_custom_call.1} parent=27 // pred_fallthru
          _
        // Predicated region
        $region41: #{tpu_custom_call.1} parent=27 // pred_check
          %p2244 = pneg %p142
        $region42: #{tpu_custom_call.1} parent=27 // pred_check_branch
          %2246 = sbr.rel (%p2244) target = $region44
        $region43: #{tpu_custom_call.1} parent=27 // pred_region
          %s2248 = ssub.s32 16, 16
          %2249 = vsyncadd %s2212, %s2248
          %s2250 = smul.addr %s25, 16
          %s2251 = scalar_lea.hbm %s4, %s2250
          %s2253 = sshll.u32 %s2214, 4
          %s2254 = int_to_ptr.vmem [resolvable:$true] %s2253
          %2256 = dma.vmem_to_hbm [thread:$0]  %s2254, 16, %s2251, %s2212
        $region44: #{tpu_custom_call.1} parent=27 // pred_fallthru
          _
      $region28: #{tpu_custom_call.1} parent=5 // pred_fallthru
        _
      %p2257 = scmp.le.s32.totalorder 2, %s20
      // Predicated region
      $region45: #{tpu_custom_call.1} parent=5 // pred_check
        %p2258 = pneg %p2257
      $region46: #{tpu_custom_call.1} parent=5 // pred_check_branch
        %2260 = sbr.rel (%p2258) target = $region48
      $region47: #{tpu_custom_call.1} parent=5 // pred_region
        %s2261 = ssub.s32 %s20, 2
        // Predicated region
        $region49: #{tpu_custom_call.1} parent=47 // pred_check
          %p2262 = pneg %p96
        $region50: #{tpu_custom_call.1} parent=47 // pred_check_branch
          %2264 = sbr.rel (%p2262) target = $region52
        $region51: #{tpu_custom_call.1} parent=47 // pred_region
          %s2265 = sand.u32 %s81, 1
          %s2266 = scalar_lea.sflag [#allocation5], %s2265
          %s2267 = sand.u32 %s81, 1
          %s2268 = smul.addr %s2267, 256
          %s2269 = scalar_lea.vmem [#allocation6], %s2268
          %2270 = dma.done %s2266, 4096
        $region52: #{tpu_custom_call.1} parent=47 // pred_fallthru
          _
        // Predicated region
        $region53: #{tpu_custom_call.1} parent=47 // pred_check
          %p2271 = pneg %p122
        $region54: #{tpu_custom_call.1} parent=47 // pred_check_branch
          %2273 = sbr.rel (%p2271) target = $region56
        $region55: #{tpu_custom_call.1} parent=47 // pred_region
          %s2274 = sand.u32 %s26, 1
          %s2275 = scalar_lea.sflag [#allocation8], %s2274
          %s2276 = sand.u32 %s107, 1
          %s2277 = scalar_lea.vmem [#allocation7], %s2276
          %2278 = dma.done %s2275, 16
        $region56: #{tpu_custom_call.1} parent=47 // pred_fallthru
          _
        // Predicated region
        $region57: #{tpu_custom_call.1} parent=47 // pred_check
          %p2279 = pneg %p148
        $region58: #{tpu_custom_call.1} parent=47 // pred_check_branch
          %2281 = sbr.rel (%p2279) target = $region60
        $region59: #{tpu_custom_call.1} parent=47 // pred_region
          %s2282 = sand.u32 %s26, 1
          %s2283 = scalar_lea.sflag [#allocation8], %s2282
          %s2284 = sand.u32 %s133, 1
          %s2285 = scalar_lea.vmem [#allocation9], %s2284
          %2286 = dma.done %s2283, 16
        $region60: #{tpu_custom_call.1} parent=47 // pred_fallthru
          _
      $region48: #{tpu_custom_call.1} parent=5 // pred_fallthru
        _
    $region6: #{tpu_custom_call.1} parent=1 // loop_footer
      %s24 = sadd.s32 1, %s20
    $region7: #{tpu_custom_call.1} parent=1 // loop_footer_branch
      %19 = sbr.rel target = $region3
    $region8: #{tpu_custom_call.1} parent=1 // loop_exit
      _
    %2287 = vsyncpa [#allocation4], 1
    %s2288 = scalar_lea.sflag [#allocation4], 1
    %2289 = vsyncpa %s2288, 1
    %2290 = vsyncpa [#allocation5], 1
    %s2291 = scalar_lea.sflag [#allocation5], 1
    %2292 = vsyncpa %s2291, 1
    %2293 = vsyncpa [#allocation8], 1
    %s2294 = scalar_lea.sflag [#allocation8], 1
    %2295 = vsyncpa %s2294, 1

</llo_original>
